<compile_context>
chip_gen: v7x
topology: tpu7x:2x2x1
jax: 0.10.0
libtpu: 0.0.40
codegen_flags: <defaults>
</compile_context>

<pallas_src>
import jax
import jax.numpy as jnp
from jax.experimental import pallas as pl
from jax.experimental.pallas import tpu as pltpu

NB_MOVIES = 256   # synthetic stand-in for nb_movies (dataset-derived in the original)
H1 = 20           # logical hidden sizes (as in the PyTorch module)
H2 = 10
H_PAD = 128       # hidden dims zero-padded to one full lane width (keep at 128)

BATCH = 512       # grid of 2 parallel steps -> both v7x TensorCores get work
TB = 256          # batch tile per grid step (multiple of 8 sublanes, MXU-friendly)


def sae_kernel(x_ref, w1_ref, b1_ref, w2_ref, b2_ref,
               w3_ref, b3_ref, w4_ref, b4_ref, o_ref):
    # Entire forward for one batch tile; all operands live in VMEM.
    # Dots run on the MXU in bf16 with f32 accumulation; bias/sigmoid in f32.
    x = x_ref[...]                                                  # bf16 (TB, M)
    h = jnp.dot(x, w1_ref[...], preferred_element_type=jnp.float32) + b1_ref[...]
    h = jax.nn.sigmoid(h).astype(jnp.bfloat16)                      # (TB, H_PAD)
    h = jnp.dot(h, w2_ref[...], preferred_element_type=jnp.float32) + b2_ref[...]
    h = jax.nn.sigmoid(h).astype(jnp.bfloat16)                      # (TB, H_PAD)
    h = jnp.dot(h, w3_ref[...], preferred_element_type=jnp.float32) + b3_ref[...]
    h = jax.nn.sigmoid(h).astype(jnp.bfloat16)                      # (TB, H_PAD)
    out = jnp.dot(h, w4_ref[...], preferred_element_type=jnp.float32) + b4_ref[...]
    o_ref[...] = out.astype(o_ref.dtype)                            # bf16 (TB, M)


def sae_forward(x, params):
    w1, b1, w2, b2, w3, b3, w4, b4 = params
    B, M = x.shape
    assert B % TB == 0

    def full(shape):
        # weights / biases: one full block, same block index for every grid step,
        # so Pallas keeps them resident in VMEM across the grid.
        return pl.BlockSpec(shape, lambda i: (0, 0))

    param_bytes = sum(int(a.size) * a.dtype.itemsize
                      for a in (w1, b1, w2, b2, w3, b3, w4, b4))
    # Padded work actually executed by the kernel (scheduler hint for XLA).
    cost = pl.CostEstimate(
        flops=2 * B * (M * H_PAD + H_PAD * H_PAD + H_PAD * H_PAD + H_PAD * M),
        transcendentals=3 * B * H_PAD,
        bytes_accessed=B * M * 2 + B * M * 2 + param_bytes,  # x bf16 + out bf16 + params
    )

    return pl.pallas_call(
        sae_kernel,
        out_shape=jax.ShapeDtypeStruct((B, M), jnp.bfloat16),
        grid_spec=pl.GridSpec(
            grid=(B // TB,),
            in_specs=[
                pl.BlockSpec((TB, M), lambda i: (i, 0)),   # x tile
                full(w1.shape), full(b1.shape),
                full(w2.shape), full(b2.shape),
                full(w3.shape), full(b3.shape),
                full(w4.shape), full(b4.shape),
            ],
            out_specs=pl.BlockSpec((TB, M), lambda i: (i, 0)),
        ),
        compiler_params=pltpu.CompilerParams(
            dimension_semantics=("parallel",)),
        cost_estimate=cost,
    )(x, w1, b1, w2, b2, w3, b3, w4, b4)


def init_params(key):
    # PyTorch-style U(-1/sqrt(fan_in), 1/sqrt(fan_in)) init on the logical shapes,
    # then zero-padded to lane-dense shapes.  Padded rows/cols are exactly zero, so
    # the 0.5 sigmoid outputs on padded lanes contribute nothing downstream.
    def linear_padded(key, fan_in, fan_out, pad_in, pad_out):
        kw, kb = jax.random.split(key)
        bound = 1.0 / jnp.sqrt(float(fan_in))
        w = jax.random.uniform(kw, (fan_in, fan_out), jnp.float32, -bound, bound)
        b = jax.random.uniform(kb, (1, fan_out), jnp.float32, -bound, bound)
        w_p = jnp.zeros((pad_in, pad_out), jnp.float32).at[:fan_in, :fan_out].set(w)
        b_p = jnp.zeros((1, pad_out), jnp.float32).at[:, :fan_out].set(b)
        return w_p.astype(jnp.bfloat16), b_p  # weights bf16, biases f32

    k1, k2, k3, k4 = jax.random.split(key, 4)
    w1, b1 = linear_padded(k1, NB_MOVIES, H1, NB_MOVIES, H_PAD)
    w2, b2 = linear_padded(k2, H1, H2, H_PAD, H_PAD)
    w3, b3 = linear_padded(k3, H2, H1, H_PAD, H_PAD)
    w4, b4 = linear_padded(k4, H1, NB_MOVIES, H_PAD, NB_MOVIES)
    params = (w1, b1, w2, b2, w3, b3, w4, b4)

    # Inference-only invariant: padded regions must be exactly zero (checked once).
    assert not jnp.any(w1[:, H1:]).item()
    assert not jnp.any(w2[H1:, :]).item() and not jnp.any(w2[:, H2:]).item()
    assert not jnp.any(w3[H2:, :]).item() and not jnp.any(w3[:, H1:]).item()
    assert not jnp.any(w4[H1:, :]).item()
    return params


def sae_reference(x, params):
    # Same math on the *unpadded* logical slices, with the same bf16 casts,
    # so it also validates that the zero-padding scheme is exact.
    w1, b1, w2, b2, w3, b3, w4, b4 = params
    h = jax.nn.sigmoid(
        jnp.dot(x, w1[:, :H1], preferred_element_type=jnp.float32) + b1[:, :H1])
    h = h.astype(jnp.bfloat16)
    h = jax.nn.sigmoid(
        jnp.dot(h, w2[:H1, :H2], preferred_element_type=jnp.float32) + b2[:, :H2])
    h = h.astype(jnp.bfloat16)
    h = jax.nn.sigmoid(
        jnp.dot(h, w3[:H2, :H1], preferred_element_type=jnp.float32) + b3[:, :H1])
    h = h.astype(jnp.bfloat16)
    return jnp.dot(h, w4[:H1, :], preferred_element_type=jnp.float32) + b4


if __name__ == "__main__":
    key = jax.random.PRNGKey(0)
    kx, kp = jax.random.split(key)
    x = jax.random.uniform(kx, (BATCH, NB_MOVIES), jnp.float32, 0.0, 5.0)  # rating-like
    x = x.astype(jnp.bfloat16)
    params = init_params(kp)

    out = sae_forward(x, params)
    out = jax.block_until_ready(out)

    ref = sae_reference(x, params)  # f32 reference on logical (unpadded) slices
    assert out.shape == (BATCH, NB_MOVIES)
    assert out.dtype == jnp.bfloat16
    # bf16 MXU path on both sides; tolerance covers accumulation-order differences
    # plus the final bf16 output quantization (|out| ~ O(1) -> eps ~ 4e-3).
    assert jnp.allclose(out.astype(jnp.float32), ref, atol=2e-2, rtol=2e-2)

    print("KERNEL_OK")
</pallas_src>

<mosaic_0001>
module attributes {stable_mosaic.version = 11 : i64} {
  func.func @sae_kernel(%arg0: i32, %arg1: memref<256x256xbf16, #tpu.memory_space<vmem>>, %arg2: memref<256x128xbf16, #tpu.memory_space<vmem>>, %arg3: memref<1x128xf32, #tpu.memory_space<vmem>>, %arg4: memref<128x128xbf16, #tpu.memory_space<vmem>>, %arg5: memref<1x128xf32, #tpu.memory_space<vmem>>, %arg6: memref<128x128xbf16, #tpu.memory_space<vmem>>, %arg7: memref<1x128xf32, #tpu.memory_space<vmem>>, %arg8: memref<128x256xbf16, #tpu.memory_space<vmem>>, %arg9: memref<1x256xf32, #tpu.memory_space<vmem>>, %arg10: memref<256x256xbf16, #tpu.memory_space<vmem>>) attributes {dimension_semantics = [#tpu.dimension_semantics<parallel>], iteration_bounds = array<i64: 2>, scalar_prefetch = 0 : i64, scratch_operands = 0 : i64, tpu.core_type = #tpu.core_type<tc>, window_params = [{transform_indices = @transform_0, window_bounds = array<i64: 256, 256>}, {pipeline_mode = #tpu.pipeline_mode<synchronous>, transform_indices = @transform_1, window_bounds = array<i64: 256, 128>}, {pipeline_mode = #tpu.pipeline_mode<synchronous>, transform_indices = @transform_2, window_bounds = array<i64: 1, 128>}, {pipeline_mode = #tpu.pipeline_mode<synchronous>, transform_indices = @transform_3, window_bounds = array<i64: 128, 128>}, {pipeline_mode = #tpu.pipeline_mode<synchronous>, transform_indices = @transform_4, window_bounds = array<i64: 1, 128>}, {pipeline_mode = #tpu.pipeline_mode<synchronous>, transform_indices = @transform_5, window_bounds = array<i64: 128, 128>}, {pipeline_mode = #tpu.pipeline_mode<synchronous>, transform_indices = @transform_6, window_bounds = array<i64: 1, 128>}, {pipeline_mode = #tpu.pipeline_mode<synchronous>, transform_indices = @transform_7, window_bounds = array<i64: 128, 256>}, {pipeline_mode = #tpu.pipeline_mode<synchronous>, transform_indices = @transform_8, window_bounds = array<i64: 1, 256>}, {transform_indices = @transform_9, window_bounds = array<i64: 256, 256>}]} {
    %c0 = arith.constant 0 : index
    %c0_0 = arith.constant 0 : index
    %0 = vector.load %arg1[%c0, %c0_0] : memref<256x256xbf16, #tpu.memory_space<vmem>>, vector<256x256xbf16>
    %c0_1 = arith.constant 0 : index
    %c0_2 = arith.constant 0 : index
    %1 = vector.load %arg2[%c0_1, %c0_2] : memref<256x128xbf16, #tpu.memory_space<vmem>>, vector<256x128xbf16>
    %cst = arith.constant dense<0.000000e+00> : vector<256x128xf32>
    %2 = tpu.matmul %0, %1, %cst {dimension_numbers = #tpu.dot_dimension_numbers<[1], [0], [0], [1], [0, 0, 1, 1], [], []>} : vector<256x256xbf16>, vector<256x128xbf16>, vector<256x128xf32> -> vector<256x128xf32>
    %c0_3 = arith.constant 0 : index
    %c0_4 = arith.constant 0 : index
    %3 = vector.load %arg3[%c0_3, %c0_4] : memref<1x128xf32, #tpu.memory_space<vmem>>, vector<1x128xf32>
    %4 = vector.broadcast %3 : vector<1x128xf32> to vector<256x128xf32>
    %5 = arith.addf %2, %4 : vector<256x128xf32>
    %6 = arith.negf %5 : vector<256x128xf32>
    %7 = math.exp %6 : vector<256x128xf32>
    %cst_5 = arith.constant 1.000000e+00 : f32
    %8 = vector.broadcast %cst_5 : f32 to vector<256x128xf32>
    %9 = arith.addf %8, %7 : vector<256x128xf32>
    %10 = arith.divf %8, %9 : vector<256x128xf32>
    %11 = arith.truncf %10 : vector<256x128xf32> to vector<256x128xbf16>
    %c0_6 = arith.constant 0 : index
    %c0_7 = arith.constant 0 : index
    %12 = vector.load %arg4[%c0_6, %c0_7] : memref<128x128xbf16, #tpu.memory_space<vmem>>, vector<128x128xbf16>
    %cst_8 = arith.constant dense<0.000000e+00> : vector<256x128xf32>
    %13 = tpu.matmul %11, %12, %cst_8 {dimension_numbers = #tpu.dot_dimension_numbers<[1], [0], [0], [1], [0, 0, 1, 1], [], []>} : vector<256x128xbf16>, vector<128x128xbf16>, vector<256x128xf32> -> vector<256x128xf32>
    %c0_9 = arith.constant 0 : index
    %c0_10 = arith.constant 0 : index
    %14 = vector.load %arg5[%c0_9, %c0_10] : memref<1x128xf32, #tpu.memory_space<vmem>>, vector<1x128xf32>
    %15 = vector.broadcast %14 : vector<1x128xf32> to vector<256x128xf32>
    %16 = arith.addf %13, %15 : vector<256x128xf32>
    %17 = arith.negf %16 : vector<256x128xf32>
    %18 = math.exp %17 : vector<256x128xf32>
    %cst_11 = arith.constant 1.000000e+00 : f32
    %19 = vector.broadcast %cst_11 : f32 to vector<256x128xf32>
    %20 = arith.addf %19, %18 : vector<256x128xf32>
    %21 = arith.divf %19, %20 : vector<256x128xf32>
    %22 = arith.truncf %21 : vector<256x128xf32> to vector<256x128xbf16>
    %c0_12 = arith.constant 0 : index
    %c0_13 = arith.constant 0 : index
    %23 = vector.load %arg6[%c0_12, %c0_13] : memref<128x128xbf16, #tpu.memory_space<vmem>>, vector<128x128xbf16>
    %cst_14 = arith.constant dense<0.000000e+00> : vector<256x128xf32>
    %24 = tpu.matmul %22, %23, %cst_14 {dimension_numbers = #tpu.dot_dimension_numbers<[1], [0], [0], [1], [0, 0, 1, 1], [], []>} : vector<256x128xbf16>, vector<128x128xbf16>, vector<256x128xf32> -> vector<256x128xf32>
    %c0_15 = arith.constant 0 : index
    %c0_16 = arith.constant 0 : index
    %25 = vector.load %arg7[%c0_15, %c0_16] : memref<1x128xf32, #tpu.memory_space<vmem>>, vector<1x128xf32>
    %26 = vector.broadcast %25 : vector<1x128xf32> to vector<256x128xf32>
    %27 = arith.addf %24, %26 : vector<256x128xf32>
    %28 = arith.negf %27 : vector<256x128xf32>
    %29 = math.exp %28 : vector<256x128xf32>
    %cst_17 = arith.constant 1.000000e+00 : f32
    %30 = vector.broadcast %cst_17 : f32 to vector<256x128xf32>
    %31 = arith.addf %30, %29 : vector<256x128xf32>
    %32 = arith.divf %30, %31 : vector<256x128xf32>
    %33 = arith.truncf %32 : vector<256x128xf32> to vector<256x128xbf16>
    %c0_18 = arith.constant 0 : index
    %c0_19 = arith.constant 0 : index
    %34 = vector.load %arg8[%c0_18, %c0_19] : memref<128x256xbf16, #tpu.memory_space<vmem>>, vector<128x256xbf16>
    %cst_20 = arith.constant dense<0.000000e+00> : vector<256x256xf32>
    %35 = tpu.matmul %33, %34, %cst_20 {dimension_numbers = #tpu.dot_dimension_numbers<[1], [0], [0], [1], [0, 0, 1, 1], [], []>} : vector<256x128xbf16>, vector<128x256xbf16>, vector<256x256xf32> -> vector<256x256xf32>
    %c0_21 = arith.constant 0 : index
    %c0_22 = arith.constant 0 : index
    %36 = vector.load %arg9[%c0_21, %c0_22] : memref<1x256xf32, #tpu.memory_space<vmem>>, vector<1x256xf32>
    %37 = vector.broadcast %36 : vector<1x256xf32> to vector<256x256xf32>
    %38 = arith.addf %35, %37 : vector<256x256xf32>
    %39 = arith.truncf %38 : vector<256x256xf32> to vector<256x256xbf16>
    %c0_23 = arith.constant 0 : index
    %c0_24 = arith.constant 0 : index
    %40 = vector.load %arg10[%c0_23, %c0_24] : memref<256x256xbf16, #tpu.memory_space<vmem>>, vector<256x256xbf16>
    tpu.vector_store %arg10[%c0_23, %c0_24], %39 {strides = array<i32>} : memref<256x256xbf16, #tpu.memory_space<vmem>>, vector<256x256xbf16>,
    return
  }
  func.func @transform_0(%arg0: i32) -> (i32, i32) {
    %c0_i32 = arith.constant 0 : i32
    %c0_i32_0 = arith.constant 0 : i32
    return %arg0, %c0_i32 : i32, i32
  }
  func.func @transform_1(%arg0: i32) -> (i32, i32) {
    %c0_i32 = arith.constant 0 : i32
    %c0_i32_0 = arith.constant 0 : i32
    %c0_i32_1 = arith.constant 0 : i32
    return %c0_i32, %c0_i32_0 : i32, i32
  }
  func.func @transform_2(%arg0: i32) -> (i32, i32) {
    %c0_i32 = arith.constant 0 : i32
    %c0_i32_0 = arith.constant 0 : i32
    %c0_i32_1 = arith.constant 0 : i32
    return %c0_i32, %c0_i32_0 : i32, i32
  }
  func.func @transform_3(%arg0: i32) -> (i32, i32) {
    %c0_i32 = arith.constant 0 : i32
    %c0_i32_0 = arith.constant 0 : i32
    %c0_i32_1 = arith.constant 0 : i32
    return %c0_i32, %c0_i32_0 : i32, i32
  }
  func.func @transform_4(%arg0: i32) -> (i32, i32) {
    %c0_i32 = arith.constant 0 : i32
    %c0_i32_0 = arith.constant 0 : i32
    %c0_i32_1 = arith.constant 0 : i32
    return %c0_i32, %c0_i32_0 : i32, i32
  }
  func.func @transform_5(%arg0: i32) -> (i32, i32) {
    %c0_i32 = arith.constant 0 : i32
    %c0_i32_0 = arith.constant 0 : i32
    %c0_i32_1 = arith.constant 0 : i32
    return %c0_i32, %c0_i32_0 : i32, i32
  }
  func.func @transform_6(%arg0: i32) -> (i32, i32) {
    %c0_i32 = arith.constant 0 : i32
    %c0_i32_0 = arith.constant 0 : i32
    %c0_i32_1 = arith.constant 0 : i32
    return %c0_i32, %c0_i32_0 : i32, i32
  }
  func.func @transform_7(%arg0: i32) -> (i32, i32) {
    %c0_i32 = arith.constant 0 : i32
    %c0_i32_0 = arith.constant 0 : i32
    %c0_i32_1 = arith.constant 0 : i32
    return %c0_i32, %c0_i32_0 : i32, i32
  }
  func.func @transform_8(%arg0: i32) -> (i32, i32) {
    %c0_i32 = arith.constant 0 : i32
    %c0_i32_0 = arith.constant 0 : i32
    %c0_i32_1 = arith.constant 0 : i32
    return %c0_i32, %c0_i32_0 : i32, i32
  }
  func.func @transform_9(%arg0: i32) -> (i32, i32) {
    %c0_i32 = arith.constant 0 : i32
    %c0_i32_0 = arith.constant 0 : i32
    return %arg0, %c0_i32 : i32, i32
  }
}

</mosaic_0001>

<llo_original>
// kernel: tpu_custom_call.1
$region0: #{tpu_custom_call.1}
  #allocation0 [shape = 'u32[]', space=smem, size = 0x4, offset = 0x4, fixed_abs, tag = 'smem constant byte address 0x4 - core index']
  #allocation1 [shape = 'u32[144,128]{1,0:T(1,128)}', space=vmem, size = 0x12000, scoped, tag = 'internal scratch']
  %s0 = inlined_call_operand.hbm [shape: bf16[512,256], index: 0, kind: input, shape index: {}]
  %s1 = inlined_call_operand.hbm [shape: bf16[256,128], index: 1, kind: input, shape index: {}]
  %s2 = inlined_call_operand.vmem [shape: f32[1,128], index: 2, kind: input, shape index: {}]
  %s3 = inlined_call_operand.hbm [shape: bf16[128,128], index: 3, kind: input, shape index: {}]
  %s4 = inlined_call_operand.vmem [shape: f32[1,128], index: 4, kind: input, shape index: {}]
  %s5 = inlined_call_operand.hbm [shape: bf16[128,128], index: 5, kind: input, shape index: {}]
  %s6 = inlined_call_operand.vmem [shape: f32[1,128], index: 6, kind: input, shape index: {}]
  %s7 = inlined_call_operand.hbm [shape: bf16[128,256], index: 7, kind: input, shape index: {}]
  %s8 = inlined_call_operand.vmem [shape: f32[1,256], index: 8, kind: input, shape index: {}]
  %s9 = inlined_call_operand.hbm [shape: bf16[512,256], index: 9, kind: output, shape index: {}]
  %s10 = sld [smem:[#allocation0]]
  $region89: #{tpu_custom_call.1} parent=0
    _
  %s12 = ssub.s32 1, %s10
  %s13 = scalar_select 0, %s12, %s10
  $region1: #{tpu_custom_call.1} parent=0
    #allocation2 [shape = 'u8[262144]{0}', space=vmem, size = 0x40000, scoped, tag = 'input window, operand 0']
    #allocation3 [shape = 's32[2]{0}', space=sflag, size = 0x8, scoped, tag = 'scoped memory for tpu_custom_call.1']
    #allocation4 [shape = 's32[2]{0}', space=sflag, size = 0x8, scoped, tag = 'scoped memory for tpu_custom_call.1']
    #allocation5 [shape = 'u8[65536]{0}', space=vmem, size = 0x10000, scoped, tag = 'input window, operand 1, single buffered']
    #allocation6 [shape = 's32[1]{0}', space=sflag, size = 0x4, scoped, tag = 'scoped memory for tpu_custom_call.1']
    #allocation7 [shape = 'u8[32768]{0}', space=vmem, size = 0x8000, scoped, tag = 'input window, operand 3, single buffered']
    #allocation8 [shape = 'u8[32768]{0}', space=vmem, size = 0x8000, scoped, tag = 'input window, operand 5, single buffered']
    #allocation9 [shape = 's32[1]{0}', space=sflag, size = 0x4, scoped, tag = 'scoped memory for tpu_custom_call.1']
    #allocation10 [shape = 'u8[65536]{0}', space=vmem, size = 0x10000, scoped, tag = 'input window, operand 7, single buffered']
    #allocation11 [shape = 'u8[262144]{0}', space=vmem, size = 0x40000, scoped, tag = 'output window, operand 0']
    %14 = vsyncpa [#allocation3], 0
    %s15 = scalar_lea.sflag [#allocation3], 1
    %16 = vsyncpa %s15, 0
    %17 = vsyncpa [#allocation6], 0
    %18 = vsyncpa [#allocation9], 0
    %19 = vsyncpa [#allocation4], 0
    %s20 = scalar_lea.sflag [#allocation4], 1
    %21 = vsyncpa %s20, 0
    loop: start=0, step=1, limit=4
    $region2: #{tpu_custom_call.1} parent=1 // loop_pre_header
      _
    $region3: #{tpu_custom_call.1} parent=1 // loop_header
      %s23 = sphi 0, %s27
      %p24 = scmp.ge.s32.totalorder %s23, 4
      %s33 = sphi 0, %s35
      %s36 = sphi 0, %s33
      %s37 = sphi 0, %s36
      %s53 = sphi 0, %s37
      %s57 = sphi 0, %s57
      %s59 = sphi 0, %s57
      %s60 = sphi 0, %s59
      %s74 = sphi 0, %s60
      %s78 = sphi 0, %s78
      %s80 = sphi 0, %s78
      %s81 = sphi 0, %s80
      %s95 = sphi 0, %s81
      %s99 = sphi 0, %s99
      %s101 = sphi 0, %s99
      %s102 = sphi 0, %s101
      %s116 = sphi 0, %s102
      %s120 = sphi 0, %s120
      %s122 = sphi 0, %s120
      %s123 = sphi 0, %s122
      %s137 = sphi 0, %s123
      %s141 = sphi 0, %s141
      %s143 = sphi 0, %s141
      %s144 = sphi 0, %s143
      %s158 = sphi 0, %s144
      %s162 = sphi 0, %s162
      %s164 = sphi 0, %s162
      %s165 = sphi 0, %s164
      %s179 = sphi 0, %s165
      %s183 = sphi 0, %s183
      %s185 = sphi 0, %s183
      %s186 = sphi 0, %s185
      %s200 = sphi 0, %s186
      %s204 = sphi 0, %s204
      %s206 = sphi 0, %s204
      %s207 = sphi 0, %s206
      %s221 = sphi 0, %s207
      %s227 = sphi 0, %s229
      %s230 = sphi 0, %s227
      %s231 = sphi 0, %s230
      %s247 = sphi 0, %s231
    $region4: #{tpu_custom_call.1} parent=1 // loop_header_branch
      %26 = sbr.rel (%p24) target = $region8
    $region5: #{tpu_custom_call.1} parent=1 // loop_body
      %s28 = ssub.s32 %s23, 1
      %s29 = ssub.s32 %s23, 2
      %s30 = sadd.s32 %s23, 1
      %s31 = ssub.s32 %s23, %s30
      %p32 = scmp.eq.s32.totalorder %s31, 0
      %s34 = sadd.s32 %s33, 1
      %s35 = scalar_select %p32, %s33, %s34
      %p38 = pneg %p32
      %p39 = scmp.eq.s32.totalorder %s23, 1
      %p40 = por %p38, %p39
      %p41 = scmp.ne.s32.totalorder %s33, %s36
      %p42 = scmp.eq.s32.totalorder %s23, 0
      %p43 = por %p41, %p42
      %p44 = scmp.ne.s32.totalorder %s33, %s36
      %p45 = scmp.eq.s32.totalorder %s28, 1
      %p46 = por %p44, %p45
      %p47 = scmp.ne.s32.totalorder %s36, %s37
      %p48 = scmp.eq.s32.totalorder %s28, 0
      %p49 = por %p47, %p48
      %p50 = scmp.ne.s32.totalorder %s36, %s37
      %p51 = scmp.eq.s32.totalorder %s29, 1
      %p52 = por %p50, %p51
      %p54 = scmp.ne.s32.totalorder %s37, %s53
      %p55 = scmp.eq.s32.totalorder %s29, 0
      %p56 = por %p54, %p55
      %s58 = sadd.s32 %s57, 1
      %p61 = scmp.eq.s32.totalorder %s23, 1
      %p62 = scmp.ne.s32.totalorder %s57, %s59
      %p63 = scmp.eq.s32.totalorder %s23, 0
      %p64 = por %p62, %p63
      %p65 = scmp.ne.s32.totalorder %s57, %s59
      %p66 = scmp.eq.s32.totalorder %s28, 1
      %p67 = por %p65, %p66
      %p68 = scmp.ne.s32.totalorder %s59, %s60
      %p69 = scmp.eq.s32.totalorder %s28, 0
      %p70 = por %p68, %p69
      %p71 = scmp.ne.s32.totalorder %s59, %s60
      %p72 = scmp.eq.s32.totalorder %s29, 1
      %p73 = por %p71, %p72
      %p75 = scmp.ne.s32.totalorder %s60, %s74
      %p76 = scmp.eq.s32.totalorder %s29, 0
      %p77 = por %p75, %p76
      %s79 = sadd.s32 %s78, 1
      %p82 = scmp.eq.s32.totalorder %s23, 1
      %p83 = scmp.ne.s32.totalorder %s78, %s80
      %p84 = scmp.eq.s32.totalorder %s23, 0
      %p85 = por %p83, %p84
      %p86 = scmp.ne.s32.totalorder %s78, %s80
      %p87 = scmp.eq.s32.totalorder %s28, 1
      %p88 = por %p86, %p87
      %p89 = scmp.ne.s32.totalorder %s80, %s81
      %p90 = scmp.eq.s32.totalorder %s28, 0
      %p91 = por %p89, %p90
      %p92 = scmp.ne.s32.totalorder %s80, %s81
      %p93 = scmp.eq.s32.totalorder %s29, 1
      %p94 = por %p92, %p93
      %p96 = scmp.ne.s32.totalorder %s81, %s95
      %p97 = scmp.eq.s32.totalorder %s29, 0
      %p98 = por %p96, %p97
      %s100 = sadd.s32 %s99, 1
      %p103 = scmp.eq.s32.totalorder %s23, 1
      %p104 = scmp.ne.s32.totalorder %s99, %s101
      %p105 = scmp.eq.s32.totalorder %s23, 0
      %p106 = por %p104, %p105
      %p107 = scmp.ne.s32.totalorder %s99, %s101
      %p108 = scmp.eq.s32.totalorder %s28, 1
      %p109 = por %p107, %p108
      %p110 = scmp.ne.s32.totalorder %s101, %s102
      %p111 = scmp.eq.s32.totalorder %s28, 0
      %p112 = por %p110, %p111
      %p113 = scmp.ne.s32.totalorder %s101, %s102
      %p114 = scmp.eq.s32.totalorder %s29, 1
      %p115 = por %p113, %p114
      %p117 = scmp.ne.s32.totalorder %s102, %s116
      %p118 = scmp.eq.s32.totalorder %s29, 0
      %p119 = por %p117, %p118
      %s121 = sadd.s32 %s120, 1
      %p124 = scmp.eq.s32.totalorder %s23, 1
      %p125 = scmp.ne.s32.totalorder %s120, %s122
      %p126 = scmp.eq.s32.totalorder %s23, 0
      %p127 = por %p125, %p126
      %p128 = scmp.ne.s32.totalorder %s120, %s122
      %p129 = scmp.eq.s32.totalorder %s28, 1
      %p130 = por %p128, %p129
      %p131 = scmp.ne.s32.totalorder %s122, %s123
      %p132 = scmp.eq.s32.totalorder %s28, 0
      %p133 = por %p131, %p132
      %p134 = scmp.ne.s32.totalorder %s122, %s123
      %p135 = scmp.eq.s32.totalorder %s29, 1
      %p136 = por %p134, %p135
      %p138 = scmp.ne.s32.totalorder %s123, %s137
      %p139 = scmp.eq.s32.totalorder %s29, 0
      %p140 = por %p138, %p139
      %s142 = sadd.s32 %s141, 1
      %p145 = scmp.eq.s32.totalorder %s23, 1
      %p146 = scmp.ne.s32.totalorder %s141, %s143
      %p147 = scmp.eq.s32.totalorder %s23, 0
      %p148 = por %p146, %p147
      %p149 = scmp.ne.s32.totalorder %s141, %s143
      %p150 = scmp.eq.s32.totalorder %s28, 1
      %p151 = por %p149, %p150
      %p152 = scmp.ne.s32.totalorder %s143, %s144
      %p153 = scmp.eq.s32.totalorder %s28, 0
      %p154 = por %p152, %p153
      %p155 = scmp.ne.s32.totalorder %s143, %s144
      %p156 = scmp.eq.s32.totalorder %s29, 1
      %p157 = por %p155, %p156
      %p159 = scmp.ne.s32.totalorder %s144, %s158
      %p160 = scmp.eq.s32.totalorder %s29, 0
      %p161 = por %p159, %p160
      %s163 = sadd.s32 %s162, 1
      %p166 = scmp.eq.s32.totalorder %s23, 1
      %p167 = scmp.ne.s32.totalorder %s162, %s164
      %p168 = scmp.eq.s32.totalorder %s23, 0
      %p169 = por %p167, %p168
      %p170 = scmp.ne.s32.totalorder %s162, %s164
      %p171 = scmp.eq.s32.totalorder %s28, 1
      %p172 = por %p170, %p171
      %p173 = scmp.ne.s32.totalorder %s164, %s165
      %p174 = scmp.eq.s32.totalorder %s28, 0
      %p175 = por %p173, %p174
      %p176 = scmp.ne.s32.totalorder %s164, %s165
      %p177 = scmp.eq.s32.totalorder %s29, 1
      %p178 = por %p176, %p177
      %p180 = scmp.ne.s32.totalorder %s165, %s179
      %p181 = scmp.eq.s32.totalorder %s29, 0
      %p182 = por %p180, %p181
      %s184 = sadd.s32 %s183, 1
      %p187 = scmp.eq.s32.totalorder %s23, 1
      %p188 = scmp.ne.s32.totalorder %s183, %s185
      %p189 = scmp.eq.s32.totalorder %s23, 0
      %p190 = por %p188, %p189
      %p191 = scmp.ne.s32.totalorder %s183, %s185
      %p192 = scmp.eq.s32.totalorder %s28, 1
      %p193 = por %p191, %p192
      %p194 = scmp.ne.s32.totalorder %s185, %s186
      %p195 = scmp.eq.s32.totalorder %s28, 0
      %p196 = por %p194, %p195
      %p197 = scmp.ne.s32.totalorder %s185, %s186
      %p198 = scmp.eq.s32.totalorder %s29, 1
      %p199 = por %p197, %p198
      %p201 = scmp.ne.s32.totalorder %s186, %s200
      %p202 = scmp.eq.s32.totalorder %s29, 0
      %p203 = por %p201, %p202
      %s205 = sadd.s32 %s204, 1
      %p208 = scmp.eq.s32.totalorder %s23, 1
      %p209 = scmp.ne.s32.totalorder %s204, %s206
      %p210 = scmp.eq.s32.totalorder %s23, 0
      %p211 = por %p209, %p210
      %p212 = scmp.ne.s32.totalorder %s204, %s206
      %p213 = scmp.eq.s32.totalorder %s28, 1
      %p214 = por %p212, %p213
      %p215 = scmp.ne.s32.totalorder %s206, %s207
      %p216 = scmp.eq.s32.totalorder %s28, 0
      %p217 = por %p215, %p216
      %p218 = scmp.ne.s32.totalorder %s206, %s207
      %p219 = scmp.eq.s32.totalorder %s29, 1
      %p220 = por %p218, %p219
      %p222 = scmp.ne.s32.totalorder %s207, %s221
      %p223 = scmp.eq.s32.totalorder %s29, 0
      %p224 = por %p222, %p223
      %s225 = ssub.s32 %s23, %s30
      %p226 = scmp.eq.s32.totalorder %s225, 0
      %s228 = sadd.s32 %s227, 1
      %s229 = scalar_select %p226, %s227, %s228
      %p232 = pneg %p226
      %p233 = scmp.eq.s32.totalorder %s23, 1
      %p234 = por %p232, %p233
      %p235 = scmp.ne.s32.totalorder %s227, %s230
      %p236 = scmp.eq.s32.totalorder %s23, 0
      %p237 = por %p235, %p236
      %p238 = scmp.ne.s32.totalorder %s227, %s230
      %p239 = scmp.eq.s32.totalorder %s28, 1
      %p240 = por %p238, %p239
      %p241 = scmp.ne.s32.totalorder %s230, %s231
      %p242 = scmp.eq.s32.totalorder %s28, 0
      %p243 = por %p241, %p242
      %p244 = scmp.ne.s32.totalorder %s230, %s231
      %p245 = scmp.eq.s32.totalorder %s29, 1
      %p246 = por %p244, %p245
      %p248 = scmp.ne.s32.totalorder %s231, %s247
      %p249 = scmp.eq.s32.totalorder %s29, 0
      %p250 = por %p248, %p249
      %p251 = scmp.le.s32.totalorder 1, %s23
      %p252 = scmp.lt.s32.totalorder %s23, 3
      %p253 = pnand %p251, %p252
      %p254 = pneg %p253
      // Predicated region
      $region9: #{tpu_custom_call.1} parent=5 // pred_check
        _
      $region10: #{tpu_custom_call.1} parent=5 // pred_check_branch
        %256 = sbr.rel (%p253) target = $region12
      $region11: #{tpu_custom_call.1} parent=5 // pred_region
        %s257 = ssub.s32 %s23, 1
        // Predicated region
        $region13: #{tpu_custom_call.1} parent=11 // pred_check
          %p258 = pneg %p70
        $region14: #{tpu_custom_call.1} parent=11 // pred_check_branch
          %260 = sbr.rel (%p258) target = $region16
        $region15: #{tpu_custom_call.1} parent=11 // pred_region
          %s262 = ssub.s32 2048, 2048
          %263 = vsyncadd [#allocation6], %s262
          %s264 = sshll.u32 [#allocation5], 4
          %s265 = int_to_ptr.vmem [resolvable:$true] %s264
          %270 = dma.hbm_to_vmem [thread:$0]  %s1, 2048, %s265, [#allocation6], 64, 64, 4
        $region16: #{tpu_custom_call.1} parent=11 // pred_fallthru
          _
        // Predicated region
        $region17: #{tpu_custom_call.1} parent=11 // pred_check
          %p271 = pneg %p91
        $region18: #{tpu_custom_call.1} parent=11 // pred_check_branch
          %273 = sbr.rel (%p271) target = $region20
        $region19: #{tpu_custom_call.1} parent=11 // pred_region
          _
        $region20: #{tpu_custom_call.1} parent=11 // pred_fallthru
          _
        // Predicated region
        $region21: #{tpu_custom_call.1} parent=11 // pred_check
          %p274 = pneg %p112
        $region22: #{tpu_custom_call.1} parent=11 // pred_check_branch
          %276 = sbr.rel (%p274) target = $region24
        $region23: #{tpu_custom_call.1} parent=11 // pred_region
          %s278 = ssub.s32 1024, 1024
          %279 = vsyncadd [#allocation6], %s278
          %s280 = sshll.u32 [#allocation7], 4
          %s281 = int_to_ptr.vmem [resolvable:$true] %s280
          %286 = dma.hbm_to_vmem [thread:$0]  %s3, 1024, %s281, [#allocation6], 64, 64, 4
        $region24: #{tpu_custom_call.1} parent=11 // pred_fallthru
          _
        // Predicated region
        $region25: #{tpu_custom_call.1} parent=11 // pred_check
          %p287 = pneg %p133
        $region26: #{tpu_custom_call.1} parent=11 // pred_check_branch
          %289 = sbr.rel (%p287) target = $region28
        $region27: #{tpu_custom_call.1} parent=11 // pred_region
          _
        $region28: #{tpu_custom_call.1} parent=11 // pred_fallthru
          _
        // Predicated region
        $region29: #{tpu_custom_call.1} parent=11 // pred_check
          %p290 = pneg %p154
        $region30: #{tpu_custom_call.1} parent=11 // pred_check_branch
          %292 = sbr.rel (%p290) target = $region32
        $region31: #{tpu_custom_call.1} parent=11 // pred_region
          %s294 = ssub.s32 1024, 1024
          %295 = vsyncadd [#allocation9], %s294
          %s296 = sshll.u32 [#allocation8], 4
          %s297 = int_to_ptr.vmem [resolvable:$true] %s296
          %302 = dma.hbm_to_vmem [thread:$0]  %s5, 1024, %s297, [#allocation9], 64, 64, 4
        $region32: #{tpu_custom_call.1} parent=11 // pred_fallthru
          _
        // Predicated region
        $region33: #{tpu_custom_call.1} parent=11 // pred_check
          %p303 = pneg %p175
        $region34: #{tpu_custom_call.1} parent=11 // pred_check_branch
          %305 = sbr.rel (%p303) target = $region36
        $region35: #{tpu_custom_call.1} parent=11 // pred_region
          _
        $region36: #{tpu_custom_call.1} parent=11 // pred_fallthru
          _
        // Predicated region
        $region37: #{tpu_custom_call.1} parent=11 // pred_check
          %p306 = pneg %p196
        $region38: #{tpu_custom_call.1} parent=11 // pred_check_branch
          %308 = sbr.rel (%p306) target = $region40
        $region39: #{tpu_custom_call.1} parent=11 // pred_region
          %s310 = ssub.s32 2048, 2048
          %311 = vsyncadd [#allocation9], %s310
          %s312 = sshll.u32 [#allocation10], 4
          %s313 = int_to_ptr.vmem [resolvable:$true] %s312
          %318 = dma.hbm_to_vmem [thread:$0]  %s7, 2048, %s313, [#allocation9], 128, 128, 8
        $region40: #{tpu_custom_call.1} parent=11 // pred_fallthru
          _
        // Predicated region
        $region41: #{tpu_custom_call.1} parent=11 // pred_check
          %p319 = pneg %p217
        $region42: #{tpu_custom_call.1} parent=11 // pred_check_branch
          %321 = sbr.rel (%p319) target = $region44
        $region43: #{tpu_custom_call.1} parent=11 // pred_region
          _
        $region44: #{tpu_custom_call.1} parent=11 // pred_fallthru
          _
      $region12: #{tpu_custom_call.1} parent=5 // pred_fallthru
        _
      %p322 = scmp.lt.s32.totalorder %s23, 2
      // Predicated region
      $region45: #{tpu_custom_call.1} parent=5 // pred_check
        %p323 = pneg %p322
      $region46: #{tpu_custom_call.1} parent=5 // pred_check_branch
        %325 = sbr.rel (%p323) target = $region48
      $region47: #{tpu_custom_call.1} parent=5 // pred_region
        // Predicated region
        $region49: #{tpu_custom_call.1} parent=47 // pred_check
          %p326 = pneg %p43
        $region50: #{tpu_custom_call.1} parent=47 // pred_check_branch
          %328 = sbr.rel (%p326) target = $region52
        $region51: #{tpu_custom_call.1} parent=47 // pred_region
          %s329 = sand.u32 %s33, 1
          %s330 = scalar_lea.sflag [#allocation3], %s329
          %s331 = sand.u32 %s33, 1
          %s332 = smul.addr %s331, 256
          %s333 = scalar_lea.vmem [#allocation2], %s332
          %s334 = smul.u32 32, %s23
          %s336 = ssub.s32 4096, 4096
          %337 = vsyncadd %s330, %s336
          %s338 = smul.addr %s334, 2
          %s339 = smul.addr %s338, 64
          %s340 = scalar_lea.hbm %s0, %s339
          %s341 = sshll.u32 %s333, 4
          %s342 = int_to_ptr.vmem [resolvable:$true] %s341
          %347 = dma.hbm_to_vmem [thread:$0]  %s340, 4096, %s342, %s330, 128, 128, 8
        $region52: #{tpu_custom_call.1} parent=47 // pred_fallthru
          _
      $region48: #{tpu_custom_call.1} parent=5 // pred_fallthru
        _
      %p348 = scmp.le.s32.totalorder 1, %s23
      %p349 = scmp.lt.s32.totalorder %s23, 3
      %p350 = pnand %p348, %p349
      %p351 = pneg %p350
      // Predicated region
      $region53: #{tpu_custom_call.1} parent=5 // pred_check
        _
      $region54: #{tpu_custom_call.1} parent=5 // pred_check_branch
        %353 = sbr.rel (%p350) target = $region56
      $region55: #{tpu_custom_call.1} parent=5 // pred_region
        %s354 = ssub.s32 %s23, 1
        %s355 = sand.u32 %s36, 1
        %s356 = scalar_lea.sflag [#allocation3], %s355
        %s357 = sand.u32 %s36, 1
        %s358 = smul.addr %s357, 256
        %s359 = scalar_lea.vmem [#allocation2], %s358
        // Predicated region
        $region57: #{tpu_custom_call.1} parent=55 // pred_check
          %p360 = pneg %p49
        $region58: #{tpu_custom_call.1} parent=55 // pred_check_branch
          %362 = sbr.rel (%p360) target = $region60
        $region59: #{tpu_custom_call.1} parent=55 // pred_region
          %363 = dma.done %s356, 4096
        $region60: #{tpu_custom_call.1} parent=55 // pred_fallthru
          _
        // Predicated region
        $region61: #{tpu_custom_call.1} parent=55 // pred_check
          %p364 = pneg %p70
        $region62: #{tpu_custom_call.1} parent=55 // pred_check_branch
          %366 = sbr.rel (%p364) target = $region64
        $region63: #{tpu_custom_call.1} parent=55 // pred_region
          %367 = dma.done [#allocation6], 2048
        $region64: #{tpu_custom_call.1} parent=55 // pred_fallthru
          _
        // Predicated region
        $region65: #{tpu_custom_call.1} parent=55 // pred_check
          %p368 = pneg %p112
        $region66: #{tpu_custom_call.1} parent=55 // pred_check_branch
          %370 = sbr.rel (%p368) target = $region68
        $region67: #{tpu_custom_call.1} parent=55 // pred_region
          %371 = dma.done [#allocation6], 1024
        $region68: #{tpu_custom_call.1} parent=55 // pred_fallthru
          _
        // Predicated region
        $region69: #{tpu_custom_call.1} parent=55 // pred_check
          %p372 = pneg %p154
        $region70: #{tpu_custom_call.1} parent=55 // pred_check_branch
          %374 = sbr.rel (%p372) target = $region72
        $region71: #{tpu_custom_call.1} parent=55 // pred_region
          %375 = dma.done [#allocation9], 1024
        $region72: #{tpu_custom_call.1} parent=55 // pred_fallthru
          _
        // Predicated region
        $region73: #{tpu_custom_call.1} parent=55 // pred_check
          %p376 = pneg %p196
        $region74: #{tpu_custom_call.1} parent=55 // pred_check_branch
          %378 = sbr.rel (%p376) target = $region76
        $region75: #{tpu_custom_call.1} parent=55 // pred_region
          %379 = dma.done [#allocation9], 2048
        $region76: #{tpu_custom_call.1} parent=55 // pred_fallthru
          _
        %s380 = sand.u32 %s36, 1
        %s381 = scalar_lea.sflag [#allocation3], %s380
        %s382 = sand.u32 %s36, 1
        %s383 = smul.addr %s382, 256
        %s384 = scalar_lea.vmem [#allocation2], %s383
        %p385 = pneg %p49
        %p386 = pneg %p46
        %p387 = pneg %p70
        %p388 = pneg %p67
        %p389 = pneg %p91
        %p390 = pneg %p88
        %p391 = pneg %p112
        %p392 = pneg %p109
        %p393 = pneg %p133
        %p394 = pneg %p130
        %p395 = pneg %p154
        %p396 = pneg %p151
        %p397 = pneg %p175
        %p398 = pneg %p172
        %p399 = pneg %p196
        %p400 = pneg %p193
        %p401 = pneg %p217
        %p402 = pneg %p214
        %p403 = pneg %p243
        %p404 = pneg %p240
        %s405 = sand.u32 %s230, 1
        %s406 = scalar_lea.sflag [#allocation4], %s405
        %s407 = sand.u32 %s230, 1
        %s408 = smul.addr %s407, 256
        %s409 = scalar_lea.vmem [#allocation11], %s408
        %s410 = smul.u32 32, %s28
        %s411 = smul.u32 32, %s28
        %v413 = vld [vmem:[%s359] sm:$0xff]
        %v414 = vld [vmem:[%s359 + $0x8] sm:$0xff]
        %v415 = vld [vmem:[%s359 + $0x10] sm:$0xff]
        %v416 = vld [vmem:[%s359 + $0x18] sm:$0xff]
        %v417 = vld [vmem:[%s359 + $0x20] sm:$0xff]
        %v418 = vld [vmem:[%s359 + $0x28] sm:$0xff]
        %v419 = vld [vmem:[%s359 + $0x30] sm:$0xff]
        %v420 = vld [vmem:[%s359 + $0x38] sm:$0xff]
        %v421 = vld [vmem:[%s359 + $0x40] sm:$0xff]
        %v422 = vld [vmem:[%s359 + $0x48] sm:$0xff]
        %v423 = vld [vmem:[%s359 + $0x50] sm:$0xff]
        %v424 = vld [vmem:[%s359 + $0x58] sm:$0xff]
        %v425 = vld [vmem:[%s359 + $0x60] sm:$0xff]
        %v426 = vld [vmem:[%s359 + $0x68] sm:$0xff]
        %v427 = vld [vmem:[%s359 + $0x70] sm:$0xff]
        %v428 = vld [vmem:[%s359 + $0x78] sm:$0xff]
        %v429 = vld [vmem:[%s359 + $0x80] sm:$0xff]
        %v430 = vld [vmem:[%s359 + $0x88] sm:$0xff]
        %v431 = vld [vmem:[%s359 + $0x90] sm:$0xff]
        %v432 = vld [vmem:[%s359 + $0x98] sm:$0xff]
        %v433 = vld [vmem:[%s359 + $0xa0] sm:$0xff]
        %v434 = vld [vmem:[%s359 + $0xa8] sm:$0xff]
        %v435 = vld [vmem:[%s359 + $0xb0] sm:$0xff]
        %v436 = vld [vmem:[%s359 + $0xb8] sm:$0xff]
        %v437 = vld [vmem:[%s359 + $0xc0] sm:$0xff]
        %v438 = vld [vmem:[%s359 + $0xc8] sm:$0xff]
        %v439 = vld [vmem:[%s359 + $0xd0] sm:$0xff]
        %v440 = vld [vmem:[%s359 + $0xd8] sm:$0xff]
        %v441 = vld [vmem:[%s359 + $0xe0] sm:$0xff]
        %v442 = vld [vmem:[%s359 + $0xe8] sm:$0xff]
        %v443 = vld [vmem:[%s359 + $0xf0] sm:$0xff]
        %v444 = vld [vmem:[%s359 + $0xf8] sm:$0xff]
        %v445 = vld [vmem:[#allocation5] sm:$0xf]
        %v446 = vld [vmem:[#allocation5 + $0x4] sm:$0xf]
        %v447 = vld [vmem:[#allocation5 + $0x8] sm:$0xf]
        %v448 = vld [vmem:[#allocation5 + $0xc] sm:$0xf]
        %v449 = vld [vmem:[#allocation5 + $0x10] sm:$0xf]
        %v450 = vld [vmem:[#allocation5 + $0x14] sm:$0xf]
        %v451 = vld [vmem:[#allocation5 + $0x18] sm:$0xf]
        %v452 = vld [vmem:[#allocation5 + $0x1c] sm:$0xf]
        %v453 = vld [vmem:[#allocation5 + $0x20] sm:$0xf]
        %v454 = vld [vmem:[#allocation5 + $0x24] sm:$0xf]
        %v455 = vld [vmem:[#allocation5 + $0x28] sm:$0xf]
        %v456 = vld [vmem:[#allocation5 + $0x2c] sm:$0xf]
        %v457 = vld [vmem:[#allocation5 + $0x30] sm:$0xf]
        %v458 = vld [vmem:[#allocation5 + $0x34] sm:$0xf]
        %v459 = vld [vmem:[#allocation5 + $0x38] sm:$0xf]
        %v460 = vld [vmem:[#allocation5 + $0x3c] sm:$0xf]
        %v461 = vld [vmem:[#allocation5 + $0x40] sm:$0xf]
        %v462 = vld [vmem:[#allocation5 + $0x44] sm:$0xf]
        %v463 = vld [vmem:[#allocation5 + $0x48] sm:$0xf]
        %v464 = vld [vmem:[#allocation5 + $0x4c] sm:$0xf]
        %v465 = vld [vmem:[#allocation5 + $0x50] sm:$0xf]
        %v466 = vld [vmem:[#allocation5 + $0x54] sm:$0xf]
        %v467 = vld [vmem:[#allocation5 + $0x58] sm:$0xf]
        %v468 = vld [vmem:[#allocation5 + $0x5c] sm:$0xf]
        %v469 = vld [vmem:[#allocation5 + $0x60] sm:$0xf]
        %v470 = vld [vmem:[#allocation5 + $0x64] sm:$0xf]
        %v471 = vld [vmem:[#allocation5 + $0x68] sm:$0xf]
        %v472 = vld [vmem:[#allocation5 + $0x6c] sm:$0xf]
        %v473 = vld [vmem:[#allocation5 + $0x70] sm:$0xf]
        %v474 = vld [vmem:[#allocation5 + $0x74] sm:$0xf]
        %v475 = vld [vmem:[#allocation5 + $0x78] sm:$0xf]
        %v476 = vld [vmem:[#allocation5 + $0x7c] sm:$0xf]
        %v477 = vld [vmem:[%s2] sm:$0x1]
        %v479 = vlaneseq
        %v480 = vshrl.u32 %v479, 7
        %v481 = vsub.s32 0, %v480
        %v482 = vrot.slane %v477, %v481
        %v516 = vunpack.c.l.b16 %v413
        %v517 = vunpack.c.h.b16 %v413
        %v518 = vunpack.c.l.b16 %v414
        %v519 = vunpack.c.h.b16 %v414
        %v520 = vunpack.c.l.b16 %v415
        %v521 = vunpack.c.h.b16 %v415
        %v522 = vunpack.c.l.b16 %v416
        %v523 = vunpack.c.h.b16 %v416
        %v524 = vunpack.c.l.b16 %v417
        %v525 = vunpack.c.h.b16 %v417
        %v526 = vunpack.c.l.b16 %v418
        %v527 = vunpack.c.h.b16 %v418
        %v528 = vunpack.c.l.b16 %v419
        %v529 = vunpack.c.h.b16 %v419
        %v530 = vunpack.c.l.b16 %v420
        %v531 = vunpack.c.h.b16 %v420
        %v532 = vunpack.c.l.b16 %v421
        %v533 = vunpack.c.h.b16 %v421
        %v534 = vunpack.c.l.b16 %v422
        %v535 = vunpack.c.h.b16 %v422
        %v536 = vunpack.c.l.b16 %v423
        %v537 = vunpack.c.h.b16 %v423
        %v538 = vunpack.c.l.b16 %v424
        %v539 = vunpack.c.h.b16 %v424
        %v540 = vunpack.c.l.b16 %v425
        %v541 = vunpack.c.h.b16 %v425
        %v542 = vunpack.c.l.b16 %v426
        %v543 = vunpack.c.h.b16 %v426
        %v544 = vunpack.c.l.b16 %v427
        %v545 = vunpack.c.h.b16 %v427
        %v546 = vunpack.c.l.b16 %v428
        %v547 = vunpack.c.h.b16 %v428
        %v548 = vunpack.c.l.b16 %v429
        %v549 = vunpack.c.h.b16 %v429
        %v550 = vunpack.c.l.b16 %v430
        %v551 = vunpack.c.h.b16 %v430
        %v552 = vunpack.c.l.b16 %v431
        %v553 = vunpack.c.h.b16 %v431
        %v554 = vunpack.c.l.b16 %v432
        %v555 = vunpack.c.h.b16 %v432
        %v556 = vunpack.c.l.b16 %v433
        %v557 = vunpack.c.h.b16 %v433
        %v558 = vunpack.c.l.b16 %v434
        %v559 = vunpack.c.h.b16 %v434
        %v560 = vunpack.c.l.b16 %v435
        %v561 = vunpack.c.h.b16 %v435
        %v562 = vunpack.c.l.b16 %v436
        %v563 = vunpack.c.h.b16 %v436
        %v564 = vunpack.c.l.b16 %v437
        %v565 = vunpack.c.h.b16 %v437
        %v566 = vunpack.c.l.b16 %v438
        %v567 = vunpack.c.h.b16 %v438
        %v568 = vunpack.c.l.b16 %v439
        %v569 = vunpack.c.h.b16 %v439
        %v570 = vunpack.c.l.b16 %v440
        %v571 = vunpack.c.h.b16 %v440
        %v572 = vunpack.c.l.b16 %v441
        %v573 = vunpack.c.h.b16 %v441
        %v574 = vunpack.c.l.b16 %v442
        %v575 = vunpack.c.h.b16 %v442
        %v576 = vunpack.c.l.b16 %v443
        %v577 = vunpack.c.h.b16 %v443
        %v578 = vunpack.c.l.b16 %v444
        %v579 = vunpack.c.h.b16 %v444
        %v580 = vpack.c.b16 %v518, %v516
        %v581 = vpack.c.b16 %v519, %v517
        %v582 = vpack.c.b16 %v522, %v520
        %v583 = vpack.c.b16 %v523, %v521
        %v584 = vpack.c.b16 %v526, %v524
        %v585 = vpack.c.b16 %v527, %v525
        %v586 = vpack.c.b16 %v530, %v528
        %v587 = vpack.c.b16 %v531, %v529
        %v588 = vpack.c.b16 %v534, %v532
        %v589 = vpack.c.b16 %v535, %v533
        %v590 = vpack.c.b16 %v538, %v536
        %v591 = vpack.c.b16 %v539, %v537
        %v592 = vpack.c.b16 %v542, %v540
        %v593 = vpack.c.b16 %v543, %v541
        %v594 = vpack.c.b16 %v546, %v544
        %v595 = vpack.c.b16 %v547, %v545
        %v596 = vpack.c.b16 %v550, %v548
        %v597 = vpack.c.b16 %v551, %v549
        %v598 = vpack.c.b16 %v554, %v552
        %v599 = vpack.c.b16 %v555, %v553
        %v600 = vpack.c.b16 %v558, %v556
        %v601 = vpack.c.b16 %v559, %v557
        %v602 = vpack.c.b16 %v562, %v560
        %v603 = vpack.c.b16 %v563, %v561
        %v604 = vpack.c.b16 %v566, %v564
        %v605 = vpack.c.b16 %v567, %v565
        %v606 = vpack.c.b16 %v570, %v568
        %v607 = vpack.c.b16 %v571, %v569
        %v608 = vpack.c.b16 %v574, %v572
        %v609 = vpack.c.b16 %v575, %v573
        %v610 = vpack.c.b16 %v578, %v576
        %v611 = vpack.c.b16 %v579, %v577
        %v676 = vunpack.c.l.b16 %v445
        %v677 = vunpack.c.l.b16 %v446
        %v678 = vunpack.c.l.b16 %v447
        %v679 = vunpack.c.l.b16 %v448
        %v680 = vunpack.c.l.b16 %v449
        %v681 = vunpack.c.l.b16 %v450
        %v682 = vunpack.c.l.b16 %v451
        %v683 = vunpack.c.l.b16 %v452
        %v684 = vunpack.c.l.b16 %v453
        %v685 = vunpack.c.l.b16 %v454
        %v686 = vunpack.c.l.b16 %v455
        %v687 = vunpack.c.l.b16 %v456
        %v688 = vunpack.c.l.b16 %v457
        %v689 = vunpack.c.l.b16 %v458
        %v690 = vunpack.c.l.b16 %v459
        %v691 = vunpack.c.l.b16 %v460
        %v692 = vunpack.c.l.b16 %v461
        %v693 = vunpack.c.l.b16 %v462
        %v694 = vunpack.c.l.b16 %v463
        %v695 = vunpack.c.l.b16 %v464
        %v696 = vunpack.c.l.b16 %v465
        %v697 = vunpack.c.l.b16 %v466
        %v698 = vunpack.c.l.b16 %v467
        %v699 = vunpack.c.l.b16 %v468
        %v700 = vunpack.c.l.b16 %v469
        %v701 = vunpack.c.l.b16 %v470
        %v702 = vunpack.c.l.b16 %v471
        %v703 = vunpack.c.l.b16 %v472
        %v704 = vunpack.c.l.b16 %v473
        %v705 = vunpack.c.l.b16 %v474
        %v706 = vunpack.c.l.b16 %v475
        %v707 = vunpack.c.l.b16 %v476
        %v708 = vpack.c.b16 %v677, %v676
        %v709 = vpack.c.b16 %v679, %v678
        %v710 = vpack.c.b16 %v681, %v680
        %v711 = vpack.c.b16 %v683, %v682
        %v712 = vpack.c.b16 %v685, %v684
        %v713 = vpack.c.b16 %v687, %v686
        %v714 = vpack.c.b16 %v689, %v688
        %v715 = vpack.c.b16 %v691, %v690
        %v716 = vpack.c.b16 %v693, %v692
        %v717 = vpack.c.b16 %v695, %v694
        %v718 = vpack.c.b16 %v697, %v696
        %v719 = vpack.c.b16 %v699, %v698
        %v720 = vpack.c.b16 %v701, %v700
        %v721 = vpack.c.b16 %v703, %v702
        %v722 = vpack.c.b16 %v705, %v704
        %v723 = vpack.c.b16 %v707, %v706
        %740 = vmatprep.subr.bf16.mxu0 0
        %741 = vmatpush1.bf16.msra.mxu0 %v708
        %742 = vmatprep.subr.bf16.mxu0 0
        %743 = vmatpush1.bf16.msra.mxu0 %v709
        %744 = vmatprep.subr.bf16.mxu0 0
        %745 = vmatpush1.bf16.msra.mxu0 %v710
        %746 = vmatprep.subr.bf16.mxu0 0
        %747 = vmatpush1.bf16.msra.mxu0 %v711
        %748 = vmatprep.subr.bf16.mxu0 0
        %749 = vmatpush1.bf16.msra.mxu0 %v712
        %750 = vmatprep.subr.bf16.mxu0 0
        %751 = vmatpush1.bf16.msra.mxu0 %v713
        %752 = vmatprep.subr.bf16.mxu0 0
        %753 = vmatpush1.bf16.msra.mxu0 %v714
        %754 = vmatprep.subr.bf16.mxu0 0
        %755 = vmatpush1.bf16.msra.mxu0 %v715
        %756 = vmatprep.subr.bf16.mxu0 0
        %757 = vmatpush1.bf16.msra.mxu0 %v716
        %758 = vmatprep.subr.bf16.mxu0 0
        %759 = vmatpush1.bf16.msra.mxu0 %v717
        %760 = vmatprep.subr.bf16.mxu0 0
        %761 = vmatpush1.bf16.msra.mxu0 %v718
        %762 = vmatprep.subr.bf16.mxu0 0
        %763 = vmatpush1.bf16.msra.mxu0 %v719
        %764 = vmatprep.subr.bf16.mxu0 0
        %765 = vmatpush1.bf16.msra.mxu0 %v720
        %766 = vmatprep.subr.bf16.mxu0 0
        %767 = vmatpush1.bf16.msra.mxu0 %v721
        %768 = vmatprep.subr.bf16.mxu0 0
        %769 = vmatpush1.bf16.msra.mxu0 %v722
        %770 = vmatprep.subr.bf16.mxu0 0
        %771 = vmatpush1.bf16.msra.mxu0 %v723
        %772 = vmatprep.mubr.bf16.mxu0 %v581
        %773 = vmatmul.mubr.bf16.gmra.mrb[0].mxu0 %v580
        %v774 = vpop.f32.mrb[0].mxu0
        %v775 = vadd.f32 %v482, %v774
        %v776 = vpop.f32.mrb[0].mxu0
        %v777 = vpop.f32.mrb[0].mxu0
        %v778 = vadd.f32 %v482, %v777
        %v779 = vpop.f32.mrb[0].mxu0
        %780 = vmatprep.mubr.bf16.mxu0 %v583
        %781 = vmatmul.mubr.bf16.gmra.mrb[0].mxu0 %v582
        %v782 = vpop.f32.mrb[0].mxu0
        %v783 = vadd.f32 %v482, %v782
        %v784 = vpop.f32.mrb[0].mxu0
        %v785 = vpop.f32.mrb[0].mxu0
        %v786 = vadd.f32 %v482, %v785
        %v787 = vpop.f32.mrb[0].mxu0
        %788 = vmatprep.mubr.bf16.mxu0 %v585
        %789 = vmatmul.mubr.bf16.gmra.mrb[0].mxu0 %v584
        %v790 = vpop.f32.mrb[0].mxu0
        %v791 = vadd.f32 %v482, %v790
        %v792 = vpop.f32.mrb[0].mxu0
        %v793 = vpop.f32.mrb[0].mxu0
        %v794 = vadd.f32 %v482, %v793
        %v795 = vpop.f32.mrb[0].mxu0
        %796 = vmatprep.mubr.bf16.mxu0 %v587
        %797 = vmatmul.mubr.bf16.gmra.mrb[0].mxu0 %v586
        %v798 = vpop.f32.mrb[0].mxu0
        %v799 = vadd.f32 %v482, %v798
        %v800 = vpop.f32.mrb[0].mxu0
        %v801 = vpop.f32.mrb[0].mxu0
        %v802 = vadd.f32 %v482, %v801
        %v803 = vpop.f32.mrb[0].mxu0
        %804 = vmatprep.mubr.bf16.mxu0 %v589
        %805 = vmatmul.mubr.bf16.gmra.mrb[0].mxu0 %v588
        %v806 = vpop.f32.mrb[0].mxu0
        %v807 = vadd.f32 %v482, %v806
        %v808 = vpop.f32.mrb[0].mxu0
        %v809 = vpop.f32.mrb[0].mxu0
        %v810 = vadd.f32 %v482, %v809
        %v811 = vpop.f32.mrb[0].mxu0
        %812 = vmatprep.mubr.bf16.mxu0 %v591
        %813 = vmatmul.mubr.bf16.gmra.mrb[0].mxu0 %v590
        %v814 = vpop.f32.mrb[0].mxu0
        %v815 = vadd.f32 %v482, %v814
        %v816 = vpop.f32.mrb[0].mxu0
        %v817 = vpop.f32.mrb[0].mxu0
        %v818 = vadd.f32 %v482, %v817
        %v819 = vpop.f32.mrb[0].mxu0
        %820 = vmatprep.mubr.bf16.mxu0 %v593
        %821 = vmatmul.mubr.bf16.gmra.mrb[0].mxu0 %v592
        %v822 = vpop.f32.mrb[0].mxu0
        %v823 = vadd.f32 %v482, %v822
        %v824 = vpop.f32.mrb[0].mxu0
        %v825 = vpop.f32.mrb[0].mxu0
        %v826 = vadd.f32 %v482, %v825
        %v827 = vpop.f32.mrb[0].mxu0
        %828 = vmatprep.mubr.bf16.mxu0 %v595
        %829 = vmatmul.mubr.bf16.gmra.mrb[0].mxu0 %v594
        %v830 = vpop.f32.mrb[0].mxu0
        %v831 = vadd.f32 %v482, %v830
        %v832 = vpop.f32.mrb[0].mxu0
        %v833 = vpop.f32.mrb[0].mxu0
        %v834 = vadd.f32 %v482, %v833
        %v835 = vpop.f32.mrb[0].mxu0
        %836 = vmatprep.mubr.bf16.mxu0 %v597
        %837 = vmatmul.mubr.bf16.gmra.mrb[0].mxu0 %v596
        %v838 = vpop.f32.mrb[0].mxu0
        %v839 = vadd.f32 %v482, %v838
        %v840 = vpop.f32.mrb[0].mxu0
        %v841 = vpop.f32.mrb[0].mxu0
        %v842 = vadd.f32 %v482, %v841
        %v843 = vpop.f32.mrb[0].mxu0
        %844 = vmatprep.mubr.bf16.mxu0 %v599
        %845 = vmatmul.mubr.bf16.gmra.mrb[0].mxu0 %v598
        %v846 = vpop.f32.mrb[0].mxu0
        %v847 = vadd.f32 %v482, %v846
        %v848 = vpop.f32.mrb[0].mxu0
        %v849 = vpop.f32.mrb[0].mxu0
        %v850 = vadd.f32 %v482, %v849
        %v851 = vpop.f32.mrb[0].mxu0
        %852 = vmatprep.mubr.bf16.mxu0 %v601
        %853 = vmatmul.mubr.bf16.gmra.mrb[0].mxu0 %v600
        %v854 = vpop.f32.mrb[0].mxu0
        %v855 = vadd.f32 %v482, %v854
        %v856 = vpop.f32.mrb[0].mxu0
        %v857 = vpop.f32.mrb[0].mxu0
        %v858 = vadd.f32 %v482, %v857
        %v859 = vpop.f32.mrb[0].mxu0
        %860 = vmatprep.mubr.bf16.mxu0 %v603
        %861 = vmatmul.mubr.bf16.gmra.mrb[0].mxu0 %v602
        %v862 = vpop.f32.mrb[0].mxu0
        %v863 = vadd.f32 %v482, %v862
        %v864 = vpop.f32.mrb[0].mxu0
        %v865 = vpop.f32.mrb[0].mxu0
        %v866 = vadd.f32 %v482, %v865
        %v867 = vpop.f32.mrb[0].mxu0
        %868 = vmatprep.mubr.bf16.mxu0 %v605
        %869 = vmatmul.mubr.bf16.gmra.mrb[0].mxu0 %v604
        %v870 = vpop.f32.mrb[0].mxu0
        %v871 = vadd.f32 %v482, %v870
        %v872 = vpop.f32.mrb[0].mxu0
        %v873 = vpop.f32.mrb[0].mxu0
        %v874 = vadd.f32 %v482, %v873
        %v875 = vpop.f32.mrb[0].mxu0
        %876 = vmatprep.mubr.bf16.mxu0 %v607
        %877 = vmatmul.mubr.bf16.gmra.mrb[0].mxu0 %v606
        %v878 = vpop.f32.mrb[0].mxu0
        %v879 = vadd.f32 %v482, %v878
        %v880 = vpop.f32.mrb[0].mxu0
        %v881 = vpop.f32.mrb[0].mxu0
        %v882 = vadd.f32 %v482, %v881
        %v883 = vpop.f32.mrb[0].mxu0
        %884 = vmatprep.mubr.bf16.mxu0 %v609
        %885 = vmatmul.mubr.bf16.gmra.mrb[0].mxu0 %v608
        %v886 = vpop.f32.mrb[0].mxu0
        %v887 = vadd.f32 %v482, %v886
        %v888 = vpop.f32.mrb[0].mxu0
        %v889 = vpop.f32.mrb[0].mxu0
        %v890 = vadd.f32 %v482, %v889
        %v891 = vpop.f32.mrb[0].mxu0
        %892 = vmatprep.mubr.bf16.mxu0 %v611
        %893 = vmatmul.mubr.bf16.gmra.mrb[0].mxu0 %v610
        %v894 = vpop.f32.mrb[0].mxu0
        %v895 = vadd.f32 %v482, %v894
        %v896 = vpop.f32.mrb[0].mxu0
        %v897 = vpop.f32.mrb[0].mxu0
        %v898 = vadd.f32 %v482, %v897
        %v899 = vpop.f32.mrb[0].mxu0
        %900 = vdwg.mxu0
        %v901 = vxor.u32 %v775, 2147483648
        %v902 = vxor.u32 %v778, 2147483648
        %v903 = vxor.u32 %v783, 2147483648
        %v904 = vxor.u32 %v786, 2147483648
        %v905 = vxor.u32 %v791, 2147483648
        %v906 = vxor.u32 %v794, 2147483648
        %v907 = vxor.u32 %v799, 2147483648
        %v908 = vxor.u32 %v802, 2147483648
        %v909 = vxor.u32 %v807, 2147483648
        %v910 = vxor.u32 %v810, 2147483648
        %v911 = vxor.u32 %v815, 2147483648
        %v912 = vxor.u32 %v818, 2147483648
        %v913 = vxor.u32 %v823, 2147483648
        %v914 = vxor.u32 %v826, 2147483648
        %v915 = vxor.u32 %v831, 2147483648
        %v916 = vxor.u32 %v834, 2147483648
        %v917 = vxor.u32 %v839, 2147483648
        %v918 = vxor.u32 %v842, 2147483648
        %v919 = vxor.u32 %v847, 2147483648
        %v920 = vxor.u32 %v850, 2147483648
        %v921 = vxor.u32 %v855, 2147483648
        %v922 = vxor.u32 %v858, 2147483648
        %v923 = vxor.u32 %v863, 2147483648
        %v924 = vxor.u32 %v866, 2147483648
        %v925 = vxor.u32 %v871, 2147483648
        %v926 = vxor.u32 %v874, 2147483648
        %v927 = vxor.u32 %v879, 2147483648
        %v928 = vxor.u32 %v882, 2147483648
        %v929 = vxor.u32 %v887, 2147483648
        %v930 = vxor.u32 %v890, 2147483648
        %v931 = vxor.u32 %v895, 2147483648
        %v932 = vxor.u32 %v898, 2147483648
        %v933 = vmul.f32 %v901, 1.442695
        %v934 = vpow.pop %v933
        %v935 = vmul.f32 %v902, 1.442695
        %v936 = vpow.pop %v935
        %v937 = vmul.f32 %v903, 1.442695
        %v938 = vpow.pop %v937
        %v939 = vmul.f32 %v904, 1.442695
        %v940 = vpow.pop %v939
        %v941 = vmul.f32 %v905, 1.442695
        %v942 = vpow.pop %v941
        %v943 = vmul.f32 %v906, 1.442695
        %v944 = vpow.pop %v943
        %v945 = vmul.f32 %v907, 1.442695
        %v946 = vpow.pop %v945
        %v947 = vmul.f32 %v908, 1.442695
        %v948 = vpow.pop %v947
        %v949 = vmul.f32 %v909, 1.442695
        %v950 = vpow.pop %v949
        %v951 = vmul.f32 %v910, 1.442695
        %v952 = vpow.pop %v951
        %v953 = vmul.f32 %v911, 1.442695
        %v954 = vpow.pop %v953
        %v955 = vmul.f32 %v912, 1.442695
        %v956 = vpow.pop %v955
        %v957 = vmul.f32 %v913, 1.442695
        %v958 = vpow.pop %v957
        %v959 = vmul.f32 %v914, 1.442695
        %v960 = vpow.pop %v959
        %v961 = vmul.f32 %v915, 1.442695
        %v962 = vpow.pop %v961
        %v963 = vmul.f32 %v916, 1.442695
        %v964 = vpow.pop %v963
        %v965 = vmul.f32 %v917, 1.442695
        %v966 = vpow.pop %v965
        %v967 = vmul.f32 %v918, 1.442695
        %v968 = vpow.pop %v967
        %v969 = vmul.f32 %v919, 1.442695
        %v970 = vpow.pop %v969
        %v971 = vmul.f32 %v920, 1.442695
        %v972 = vpow.pop %v971
        %v973 = vmul.f32 %v921, 1.442695
        %v974 = vpow.pop %v973
        %v975 = vmul.f32 %v922, 1.442695
        %v976 = vpow.pop %v975
        %v977 = vmul.f32 %v923, 1.442695
        %v978 = vpow.pop %v977
        %v979 = vmul.f32 %v924, 1.442695
        %v980 = vpow.pop %v979
        %v981 = vmul.f32 %v925, 1.442695
        %v982 = vpow.pop %v981
        %v983 = vmul.f32 %v926, 1.442695
        %v984 = vpow.pop %v983
        %v985 = vmul.f32 %v927, 1.442695
        %v986 = vpow.pop %v985
        %v987 = vmul.f32 %v928, 1.442695
        %v988 = vpow.pop %v987
        %v989 = vmul.f32 %v929, 1.442695
        %v990 = vpow.pop %v989
        %v991 = vmul.f32 %v930, 1.442695
        %v992 = vpow.pop %v991
        %v993 = vmul.f32 %v931, 1.442695
        %v994 = vpow.pop %v993
        %v995 = vmul.f32 %v932, 1.442695
        %v996 = vpow.pop %v995
        %v997 = vadd.f32 %v934, 1.0
        %v998 = vadd.f32 %v936, 1.0
        %v999 = vadd.f32 %v938, 1.0
        %v1000 = vadd.f32 %v940, 1.0
        %v1001 = vadd.f32 %v942, 1.0
        %v1002 = vadd.f32 %v944, 1.0
        %v1003 = vadd.f32 %v946, 1.0
        %v1004 = vadd.f32 %v948, 1.0
        %v1005 = vadd.f32 %v950, 1.0
        %v1006 = vadd.f32 %v952, 1.0
        %v1007 = vadd.f32 %v954, 1.0
        %v1008 = vadd.f32 %v956, 1.0
        %v1009 = vadd.f32 %v958, 1.0
        %v1010 = vadd.f32 %v960, 1.0
        %v1011 = vadd.f32 %v962, 1.0
        %v1012 = vadd.f32 %v964, 1.0
        %v1013 = vadd.f32 %v966, 1.0
        %v1014 = vadd.f32 %v968, 1.0
        %v1015 = vadd.f32 %v970, 1.0
        %v1016 = vadd.f32 %v972, 1.0
        %v1017 = vadd.f32 %v974, 1.0
        %v1018 = vadd.f32 %v976, 1.0
        %v1019 = vadd.f32 %v978, 1.0
        %v1020 = vadd.f32 %v980, 1.0
        %v1021 = vadd.f32 %v982, 1.0
        %v1022 = vadd.f32 %v984, 1.0
        %v1023 = vadd.f32 %v986, 1.0
        %v1024 = vadd.f32 %v988, 1.0
        %v1025 = vadd.f32 %v990, 1.0
        %v1026 = vadd.f32 %v992, 1.0
        %v1027 = vadd.f32 %v994, 1.0
        %v1028 = vadd.f32 %v996, 1.0
        %v1029 = vrcp.pop %v997
        %v1030 = vmul.f32 1.0, %v1029
        %v1031 = vrcp.pop %v998
        %v1032 = vmul.f32 1.0, %v1031
        %v1033 = vrcp.pop %v999
        %v1034 = vmul.f32 1.0, %v1033
        %v1035 = vrcp.pop %v1000
        %v1036 = vmul.f32 1.0, %v1035
        %v1037 = vrcp.pop %v1001
        %v1038 = vmul.f32 1.0, %v1037
        %v1039 = vrcp.pop %v1002
        %v1040 = vmul.f32 1.0, %v1039
        %v1041 = vrcp.pop %v1003
        %v1042 = vmul.f32 1.0, %v1041
        %v1043 = vrcp.pop %v1004
        %v1044 = vmul.f32 1.0, %v1043
        %v1045 = vrcp.pop %v1005
        %v1046 = vmul.f32 1.0, %v1045
        %v1047 = vrcp.pop %v1006
        %v1048 = vmul.f32 1.0, %v1047
        %v1049 = vrcp.pop %v1007
        %v1050 = vmul.f32 1.0, %v1049
        %v1051 = vrcp.pop %v1008
        %v1052 = vmul.f32 1.0, %v1051
        %v1053 = vrcp.pop %v1009
        %v1054 = vmul.f32 1.0, %v1053
        %v1055 = vrcp.pop %v1010
        %v1056 = vmul.f32 1.0, %v1055
        %v1057 = vrcp.pop %v1011
        %v1058 = vmul.f32 1.0, %v1057
        %v1059 = vrcp.pop %v1012
        %v1060 = vmul.f32 1.0, %v1059
        %v1061 = vrcp.pop %v1013
        %v1062 = vmul.f32 1.0, %v1061
        %v1063 = vrcp.pop %v1014
        %v1064 = vmul.f32 1.0, %v1063
        %v1065 = vrcp.pop %v1015
        %v1066 = vmul.f32 1.0, %v1065
        %v1067 = vrcp.pop %v1016
        %v1068 = vmul.f32 1.0, %v1067
        %v1069 = vrcp.pop %v1017
        %v1070 = vmul.f32 1.0, %v1069
        %v1071 = vrcp.pop %v1018
        %v1072 = vmul.f32 1.0, %v1071
        %v1073 = vrcp.pop %v1019
        %v1074 = vmul.f32 1.0, %v1073
        %v1075 = vrcp.pop %v1020
        %v1076 = vmul.f32 1.0, %v1075
        %v1077 = vrcp.pop %v1021
        %v1078 = vmul.f32 1.0, %v1077
        %v1079 = vrcp.pop %v1022
        %v1080 = vmul.f32 1.0, %v1079
        %v1081 = vrcp.pop %v1023
        %v1082 = vmul.f32 1.0, %v1081
        %v1083 = vrcp.pop %v1024
        %v1084 = vmul.f32 1.0, %v1083
        %v1085 = vrcp.pop %v1025
        %v1086 = vmul.f32 1.0, %v1085
        %v1087 = vrcp.pop %v1026
        %v1088 = vmul.f32 1.0, %v1087
        %v1089 = vrcp.pop %v1027
        %v1090 = vmul.f32 1.0, %v1089
        %v1091 = vrcp.pop %v1028
        %v1092 = vmul.f32 1.0, %v1091
        %v1093 = vpack.c.bf16 %v1032, %v1030
        %v1094 = vpack.c.bf16 %v1036, %v1034
        %v1095 = vpack.c.bf16 %v1040, %v1038
        %v1096 = vpack.c.bf16 %v1044, %v1042
        %v1097 = vpack.c.bf16 %v1048, %v1046
        %v1098 = vpack.c.bf16 %v1052, %v1050
        %v1099 = vpack.c.bf16 %v1056, %v1054
        %v1100 = vpack.c.bf16 %v1060, %v1058
        %v1101 = vpack.c.bf16 %v1064, %v1062
        %v1102 = vpack.c.bf16 %v1068, %v1066
        %v1103 = vpack.c.bf16 %v1072, %v1070
        %v1104 = vpack.c.bf16 %v1076, %v1074
        %v1105 = vpack.c.bf16 %v1080, %v1078
        %v1106 = vpack.c.bf16 %v1084, %v1082
        %v1107 = vpack.c.bf16 %v1088, %v1086
        %v1108 = vpack.c.bf16 %v1092, %v1090
        %v1109 = vld [vmem:[#allocation7] sm:$0xf]
        %v1110 = vld [vmem:[#allocation7 + $0x4] sm:$0xf]
        %v1111 = vld [vmem:[#allocation7 + $0x8] sm:$0xf]
        %v1112 = vld [vmem:[#allocation7 + $0xc] sm:$0xf]
        %v1113 = vld [vmem:[#allocation7 + $0x10] sm:$0xf]
        %v1114 = vld [vmem:[#allocation7 + $0x14] sm:$0xf]
        %v1115 = vld [vmem:[#allocation7 + $0x18] sm:$0xf]
        %v1116 = vld [vmem:[#allocation7 + $0x1c] sm:$0xf]
        %v1117 = vld [vmem:[#allocation7 + $0x20] sm:$0xf]
        %v1118 = vld [vmem:[#allocation7 + $0x24] sm:$0xf]
        %v1119 = vld [vmem:[#allocation7 + $0x28] sm:$0xf]
        %v1120 = vld [vmem:[#allocation7 + $0x2c] sm:$0xf]
        %v1121 = vld [vmem:[#allocation7 + $0x30] sm:$0xf]
        %v1122 = vld [vmem:[#allocation7 + $0x34] sm:$0xf]
        %v1123 = vld [vmem:[#allocation7 + $0x38] sm:$0xf]
        %v1124 = vld [vmem:[#allocation7 + $0x3c] sm:$0xf]
        %v1125 = vld [vmem:[%s4] sm:$0x1]
        %v1127 = vlaneseq
        %v1128 = vshrl.u32 %v1127, 7
        %v1129 = vsub.s32 0, %v1128
        %v1130 = vrot.slane %v1125, %v1129
        %v1148 = vunpack.c.l.b16 %v1109
        %v1149 = vunpack.c.l.b16 %v1110
        %v1150 = vunpack.c.l.b16 %v1111
        %v1151 = vunpack.c.l.b16 %v1112
        %v1152 = vunpack.c.l.b16 %v1113
        %v1153 = vunpack.c.l.b16 %v1114
        %v1154 = vunpack.c.l.b16 %v1115
        %v1155 = vunpack.c.l.b16 %v1116
        %v1156 = vunpack.c.l.b16 %v1117
        %v1157 = vunpack.c.l.b16 %v1118
        %v1158 = vunpack.c.l.b16 %v1119
        %v1159 = vunpack.c.l.b16 %v1120
        %v1160 = vunpack.c.l.b16 %v1121
        %v1161 = vunpack.c.l.b16 %v1122
        %v1162 = vunpack.c.l.b16 %v1123
        %v1163 = vunpack.c.l.b16 %v1124
        %v1164 = vpack.c.b16 %v1149, %v1148
        %v1165 = vpack.c.b16 %v1151, %v1150
        %v1166 = vpack.c.b16 %v1153, %v1152
        %v1167 = vpack.c.b16 %v1155, %v1154
        %v1168 = vpack.c.b16 %v1157, %v1156
        %v1169 = vpack.c.b16 %v1159, %v1158
        %v1170 = vpack.c.b16 %v1161, %v1160
        %v1171 = vpack.c.b16 %v1163, %v1162
        %1180 = vmatprep.subr.bf16.mxu0 0
        %1181 = vmatpush1.bf16.msra.mxu0 %v1164
        %1182 = vmatprep.subr.bf16.mxu0 0
        %1183 = vmatpush1.bf16.msra.mxu0 %v1165
        %1184 = vmatprep.subr.bf16.mxu0 0
        %1185 = vmatpush1.bf16.msra.mxu0 %v1166
        %1186 = vmatprep.subr.bf16.mxu0 0
        %1187 = vmatpush1.bf16.msra.mxu0 %v1167
        %1188 = vmatprep.subr.bf16.mxu0 0
        %1189 = vmatpush1.bf16.msra.mxu0 %v1168
        %1190 = vmatprep.subr.bf16.mxu0 0
        %1191 = vmatpush1.bf16.msra.mxu0 %v1169
        %1192 = vmatprep.subr.bf16.mxu0 0
        %1193 = vmatpush1.bf16.msra.mxu0 %v1170
        %1194 = vmatprep.subr.bf16.mxu0 0
        %1195 = vmatpush1.bf16.msra.mxu0 %v1171
        %1196 = vmatprep.subr.bf16.mxu0 0
        %1197 = vmatpush1.bf16.msra.mxu0 0
        %1198 = vmatprep.subr.bf16.mxu0 0
        %1199 = vmatpush1.bf16.msra.mxu0 0
        %1200 = vmatprep.subr.bf16.mxu0 0
        %1201 = vmatpush1.bf16.msra.mxu0 0
        %1202 = vmatprep.subr.bf16.mxu0 0
        %1203 = vmatpush1.bf16.msra.mxu0 0
        %1204 = vmatprep.subr.bf16.mxu0 0
        %1205 = vmatpush1.bf16.msra.mxu0 0
        %1206 = vmatprep.subr.bf16.mxu0 0
        %1207 = vmatpush1.bf16.msra.mxu0 0
        %1208 = vmatprep.subr.bf16.mxu0 0
        %1209 = vmatpush1.bf16.msra.mxu0 0
        %1210 = vmatprep.subr.bf16.mxu0 0
        %1211 = vmatpush1.bf16.msra.mxu0 0
        %1212 = vmatprep.mubr.bf16.mxu0 0
        %1213 = vmatmul.mubr.bf16.gmra.mrb[0].mxu0 %v1093
        %v1214 = vpop.f32.mrb[0].mxu0
        %v1215 = vadd.f32 %v1130, %v1214
        %v1216 = vpop.f32.mrb[0].mxu0
        %v1217 = vpop.f32.mrb[0].mxu0
        %v1218 = vadd.f32 %v1130, %v1217
        %v1219 = vpop.f32.mrb[0].mxu0
        %1220 = vmatprep.mubr.bf16.mxu0 0
        %1221 = vmatmul.mubr.bf16.gmra.mrb[0].mxu0 %v1094
        %v1222 = vpop.f32.mrb[0].mxu0
        %v1223 = vadd.f32 %v1130, %v1222
        %v1224 = vpop.f32.mrb[0].mxu0
        %v1225 = vpop.f32.mrb[0].mxu0
        %v1226 = vadd.f32 %v1130, %v1225
        %v1227 = vpop.f32.mrb[0].mxu0
        %1228 = vmatprep.mubr.bf16.mxu0 0
        %1229 = vmatmul.mubr.bf16.gmra.mrb[0].mxu0 %v1095
        %v1230 = vpop.f32.mrb[0].mxu0
        %v1231 = vadd.f32 %v1130, %v1230
        %v1232 = vpop.f32.mrb[0].mxu0
        %v1233 = vpop.f32.mrb[0].mxu0
        %v1234 = vadd.f32 %v1130, %v1233
        %v1235 = vpop.f32.mrb[0].mxu0
        %1236 = vmatprep.mubr.bf16.mxu0 0
        %1237 = vmatmul.mubr.bf16.gmra.mrb[0].mxu0 %v1096
        %v1238 = vpop.f32.mrb[0].mxu0
        %v1239 = vadd.f32 %v1130, %v1238
        %v1240 = vpop.f32.mrb[0].mxu0
        %v1241 = vpop.f32.mrb[0].mxu0
        %v1242 = vadd.f32 %v1130, %v1241
        %v1243 = vpop.f32.mrb[0].mxu0
        %1244 = vmatprep.mubr.bf16.mxu0 0
        %1245 = vmatmul.mubr.bf16.gmra.mrb[0].mxu0 %v1097
        %v1246 = vpop.f32.mrb[0].mxu0
        %v1247 = vadd.f32 %v1130, %v1246
        %v1248 = vpop.f32.mrb[0].mxu0
        %v1249 = vpop.f32.mrb[0].mxu0
        %v1250 = vadd.f32 %v1130, %v1249
        %v1251 = vpop.f32.mrb[0].mxu0
        %1252 = vmatprep.mubr.bf16.mxu0 0
        %1253 = vmatmul.mubr.bf16.gmra.mrb[0].mxu0 %v1098
        %v1254 = vpop.f32.mrb[0].mxu0
        %v1255 = vadd.f32 %v1130, %v1254
        %v1256 = vpop.f32.mrb[0].mxu0
        %v1257 = vpop.f32.mrb[0].mxu0
        %v1258 = vadd.f32 %v1130, %v1257
        %v1259 = vpop.f32.mrb[0].mxu0
        %1260 = vmatprep.mubr.bf16.mxu0 0
        %1261 = vmatmul.mubr.bf16.gmra.mrb[0].mxu0 %v1099
        %v1262 = vpop.f32.mrb[0].mxu0
        %v1263 = vadd.f32 %v1130, %v1262
        %v1264 = vpop.f32.mrb[0].mxu0
        %v1265 = vpop.f32.mrb[0].mxu0
        %v1266 = vadd.f32 %v1130, %v1265
        %v1267 = vpop.f32.mrb[0].mxu0
        %1268 = vmatprep.mubr.bf16.mxu0 0
        %1269 = vmatmul.mubr.bf16.gmra.mrb[0].mxu0 %v1100
        %v1270 = vpop.f32.mrb[0].mxu0
        %v1271 = vadd.f32 %v1130, %v1270
        %v1272 = vpop.f32.mrb[0].mxu0
        %v1273 = vpop.f32.mrb[0].mxu0
        %v1274 = vadd.f32 %v1130, %v1273
        %v1275 = vpop.f32.mrb[0].mxu0
        %1276 = vmatprep.mubr.bf16.mxu0 0
        %1277 = vmatmul.mubr.bf16.gmra.mrb[0].mxu0 %v1101
        %v1278 = vpop.f32.mrb[0].mxu0
        %v1279 = vadd.f32 %v1130, %v1278
        %v1280 = vpop.f32.mrb[0].mxu0
        %v1281 = vpop.f32.mrb[0].mxu0
        %v1282 = vadd.f32 %v1130, %v1281
        %v1283 = vpop.f32.mrb[0].mxu0
        %1284 = vmatprep.mubr.bf16.mxu0 0
        %1285 = vmatmul.mubr.bf16.gmra.mrb[0].mxu0 %v1102
        %v1286 = vpop.f32.mrb[0].mxu0
        %v1287 = vadd.f32 %v1130, %v1286
        %v1288 = vpop.f32.mrb[0].mxu0
        %v1289 = vpop.f32.mrb[0].mxu0
        %v1290 = vadd.f32 %v1130, %v1289
        %v1291 = vpop.f32.mrb[0].mxu0
        %1292 = vmatprep.mubr.bf16.mxu0 0
        %1293 = vmatmul.mubr.bf16.gmra.mrb[0].mxu0 %v1103
        %v1294 = vpop.f32.mrb[0].mxu0
        %v1295 = vadd.f32 %v1130, %v1294
        %v1296 = vpop.f32.mrb[0].mxu0
        %v1297 = vpop.f32.mrb[0].mxu0
        %v1298 = vadd.f32 %v1130, %v1297
        %v1299 = vpop.f32.mrb[0].mxu0
        %1300 = vmatprep.mubr.bf16.mxu0 0
        %1301 = vmatmul.mubr.bf16.gmra.mrb[0].mxu0 %v1104
        %v1302 = vpop.f32.mrb[0].mxu0
        %v1303 = vadd.f32 %v1130, %v1302
        %v1304 = vpop.f32.mrb[0].mxu0
        %v1305 = vpop.f32.mrb[0].mxu0
        %v1306 = vadd.f32 %v1130, %v1305
        %v1307 = vpop.f32.mrb[0].mxu0
        %1308 = vmatprep.mubr.bf16.mxu0 0
        %1309 = vmatmul.mubr.bf16.gmra.mrb[0].mxu0 %v1105
        %v1310 = vpop.f32.mrb[0].mxu0
        %v1311 = vadd.f32 %v1130, %v1310
        %v1312 = vpop.f32.mrb[0].mxu0
        %v1313 = vpop.f32.mrb[0].mxu0
        %v1314 = vadd.f32 %v1130, %v1313
        %v1315 = vpop.f32.mrb[0].mxu0
        %1316 = vmatprep.mubr.bf16.mxu0 0
        %1317 = vmatmul.mubr.bf16.gmra.mrb[0].mxu0 %v1106
        %v1318 = vpop.f32.mrb[0].mxu0
        %v1319 = vadd.f32 %v1130, %v1318
        %v1320 = vpop.f32.mrb[0].mxu0
        %v1321 = vpop.f32.mrb[0].mxu0
        %v1322 = vadd.f32 %v1130, %v1321
        %v1323 = vpop.f32.mrb[0].mxu0
        %1324 = vmatprep.mubr.bf16.mxu0 0
        %1325 = vmatmul.mubr.bf16.gmra.mrb[0].mxu0 %v1107
        %v1326 = vpop.f32.mrb[0].mxu0
        %v1327 = vadd.f32 %v1130, %v1326
        %v1328 = vpop.f32.mrb[0].mxu0
        %v1329 = vpop.f32.mrb[0].mxu0
        %v1330 = vadd.f32 %v1130, %v1329
        %v1331 = vpop.f32.mrb[0].mxu0
        %1332 = vmatprep.mubr.bf16.mxu0 0
        %1333 = vmatmul.mubr.bf16.gmra.mrb[0].mxu0 %v1108
        %v1334 = vpop.f32.mrb[0].mxu0
        %v1335 = vadd.f32 %v1130, %v1334
        %v1336 = vpop.f32.mrb[0].mxu0
        %v1337 = vpop.f32.mrb[0].mxu0
        %v1338 = vadd.f32 %v1130, %v1337
        %v1339 = vpop.f32.mrb[0].mxu0
        %1340 = vdwg.mxu0
        %v1341 = vxor.u32 %v1215, 2147483648
        %v1342 = vxor.u32 %v1218, 2147483648
        %v1343 = vxor.u32 %v1223, 2147483648
        %v1344 = vxor.u32 %v1226, 2147483648
        %v1345 = vxor.u32 %v1231, 2147483648
        %v1346 = vxor.u32 %v1234, 2147483648
        %v1347 = vxor.u32 %v1239, 2147483648
        %v1348 = vxor.u32 %v1242, 2147483648
        %v1349 = vxor.u32 %v1247, 2147483648
        %v1350 = vxor.u32 %v1250, 2147483648
        %v1351 = vxor.u32 %v1255, 2147483648
        %v1352 = vxor.u32 %v1258, 2147483648
        %v1353 = vxor.u32 %v1263, 2147483648
        %v1354 = vxor.u32 %v1266, 2147483648
        %v1355 = vxor.u32 %v1271, 2147483648
        %v1356 = vxor.u32 %v1274, 2147483648
        %v1357 = vxor.u32 %v1279, 2147483648
        %v1358 = vxor.u32 %v1282, 2147483648
        %v1359 = vxor.u32 %v1287, 2147483648
        %v1360 = vxor.u32 %v1290, 2147483648
        %v1361 = vxor.u32 %v1295, 2147483648
        %v1362 = vxor.u32 %v1298, 2147483648
        %v1363 = vxor.u32 %v1303, 2147483648
        %v1364 = vxor.u32 %v1306, 2147483648
        %v1365 = vxor.u32 %v1311, 2147483648
        %v1366 = vxor.u32 %v1314, 2147483648
        %v1367 = vxor.u32 %v1319, 2147483648
        %v1368 = vxor.u32 %v1322, 2147483648
        %v1369 = vxor.u32 %v1327, 2147483648
        %v1370 = vxor.u32 %v1330, 2147483648
        %v1371 = vxor.u32 %v1335, 2147483648
        %v1372 = vxor.u32 %v1338, 2147483648
        %v1373 = vmul.f32 %v1341, 1.442695
        %v1374 = vpow.pop %v1373
        %v1375 = vmul.f32 %v1342, 1.442695
        %v1376 = vpow.pop %v1375
        %v1377 = vmul.f32 %v1343, 1.442695
        %v1378 = vpow.pop %v1377
        %v1379 = vmul.f32 %v1344, 1.442695
        %v1380 = vpow.pop %v1379
        %v1381 = vmul.f32 %v1345, 1.442695
        %v1382 = vpow.pop %v1381
        %v1383 = vmul.f32 %v1346, 1.442695
        %v1384 = vpow.pop %v1383
        %v1385 = vmul.f32 %v1347, 1.442695
        %v1386 = vpow.pop %v1385
        %v1387 = vmul.f32 %v1348, 1.442695
        %v1388 = vpow.pop %v1387
        %v1389 = vmul.f32 %v1349, 1.442695
        %v1390 = vpow.pop %v1389
        %v1391 = vmul.f32 %v1350, 1.442695
        %v1392 = vpow.pop %v1391
        %v1393 = vmul.f32 %v1351, 1.442695
        %v1394 = vpow.pop %v1393
        %v1395 = vmul.f32 %v1352, 1.442695
        %v1396 = vpow.pop %v1395
        %v1397 = vmul.f32 %v1353, 1.442695
        %v1398 = vpow.pop %v1397
        %v1399 = vmul.f32 %v1354, 1.442695
        %v1400 = vpow.pop %v1399
        %v1401 = vmul.f32 %v1355, 1.442695
        %v1402 = vpow.pop %v1401
        %v1403 = vmul.f32 %v1356, 1.442695
        %v1404 = vpow.pop %v1403
        %v1405 = vmul.f32 %v1357, 1.442695
        %v1406 = vpow.pop %v1405
        %v1407 = vmul.f32 %v1358, 1.442695
        %v1408 = vpow.pop %v1407
        %v1409 = vmul.f32 %v1359, 1.442695
        %v1410 = vpow.pop %v1409
        %v1411 = vmul.f32 %v1360, 1.442695
        %v1412 = vpow.pop %v1411
        %v1413 = vmul.f32 %v1361, 1.442695
        %v1414 = vpow.pop %v1413
        %v1415 = vmul.f32 %v1362, 1.442695
        %v1416 = vpow.pop %v1415
        %v1417 = vmul.f32 %v1363, 1.442695
        %v1418 = vpow.pop %v1417
        %v1419 = vmul.f32 %v1364, 1.442695
        %v1420 = vpow.pop %v1419
        %v1421 = vmul.f32 %v1365, 1.442695
        %v1422 = vpow.pop %v1421
        %v1423 = vmul.f32 %v1366, 1.442695
        %v1424 = vpow.pop %v1423
        %v1425 = vmul.f32 %v1367, 1.442695
        %v1426 = vpow.pop %v1425
        %v1427 = vmul.f32 %v1368, 1.442695
        %v1428 = vpow.pop %v1427
        %v1429 = vmul.f32 %v1369, 1.442695
        %v1430 = vpow.pop %v1429
        %v1431 = vmul.f32 %v1370, 1.442695
        %v1432 = vpow.pop %v1431
        %v1433 = vmul.f32 %v1371, 1.442695
        %v1434 = vpow.pop %v1433
        %v1435 = vmul.f32 %v1372, 1.442695
        %v1436 = vpow.pop %v1435
        %v1437 = vadd.f32 %v1374, 1.0
        %v1438 = vadd.f32 %v1376, 1.0
        %v1439 = vadd.f32 %v1378, 1.0
        %v1440 = vadd.f32 %v1380, 1.0
        %v1441 = vadd.f32 %v1382, 1.0
        %v1442 = vadd.f32 %v1384, 1.0
        %v1443 = vadd.f32 %v1386, 1.0
        %v1444 = vadd.f32 %v1388, 1.0
        %v1445 = vadd.f32 %v1390, 1.0
        %v1446 = vadd.f32 %v1392, 1.0
        %v1447 = vadd.f32 %v1394, 1.0
        %v1448 = vadd.f32 %v1396, 1.0
        %v1449 = vadd.f32 %v1398, 1.0
        %v1450 = vadd.f32 %v1400, 1.0
        %v1451 = vadd.f32 %v1402, 1.0
        %v1452 = vadd.f32 %v1404, 1.0
        %v1453 = vadd.f32 %v1406, 1.0
        %v1454 = vadd.f32 %v1408, 1.0
        %v1455 = vadd.f32 %v1410, 1.0
        %v1456 = vadd.f32 %v1412, 1.0
        %v1457 = vadd.f32 %v1414, 1.0
        %v1458 = vadd.f32 %v1416, 1.0
        %v1459 = vadd.f32 %v1418, 1.0
        %v1460 = vadd.f32 %v1420, 1.0
        %v1461 = vadd.f32 %v1422, 1.0
        %v1462 = vadd.f32 %v1424, 1.0
        %v1463 = vadd.f32 %v1426, 1.0
        %v1464 = vadd.f32 %v1428, 1.0
        %v1465 = vadd.f32 %v1430, 1.0
        %v1466 = vadd.f32 %v1432, 1.0
        %v1467 = vadd.f32 %v1434, 1.0
        %v1468 = vadd.f32 %v1436, 1.0
        %v1469 = vrcp.pop %v1437
        %v1470 = vmul.f32 1.0, %v1469
        %v1471 = vrcp.pop %v1438
        %v1472 = vmul.f32 1.0, %v1471
        %v1473 = vrcp.pop %v1439
        %v1474 = vmul.f32 1.0, %v1473
        %v1475 = vrcp.pop %v1440
        %v1476 = vmul.f32 1.0, %v1475
        %v1477 = vrcp.pop %v1441
        %v1478 = vmul.f32 1.0, %v1477
        %v1479 = vrcp.pop %v1442
        %v1480 = vmul.f32 1.0, %v1479
        %v1481 = vrcp.pop %v1443
        %v1482 = vmul.f32 1.0, %v1481
        %v1483 = vrcp.pop %v1444
        %v1484 = vmul.f32 1.0, %v1483
        %v1485 = vrcp.pop %v1445
        %v1486 = vmul.f32 1.0, %v1485
        %v1487 = vrcp.pop %v1446
        %v1488 = vmul.f32 1.0, %v1487
        %v1489 = vrcp.pop %v1447
        %v1490 = vmul.f32 1.0, %v1489
        %v1491 = vrcp.pop %v1448
        %v1492 = vmul.f32 1.0, %v1491
        %v1493 = vrcp.pop %v1449
        %v1494 = vmul.f32 1.0, %v1493
        %v1495 = vrcp.pop %v1450
        %v1496 = vmul.f32 1.0, %v1495
        %v1497 = vrcp.pop %v1451
        %v1498 = vmul.f32 1.0, %v1497
        %v1499 = vrcp.pop %v1452
        %v1500 = vmul.f32 1.0, %v1499
        %v1501 = vrcp.pop %v1453
        %v1502 = vmul.f32 1.0, %v1501
        %v1503 = vrcp.pop %v1454
        %v1504 = vmul.f32 1.0, %v1503
        %v1505 = vrcp.pop %v1455
        %v1506 = vmul.f32 1.0, %v1505
        %v1507 = vrcp.pop %v1456
        %v1508 = vmul.f32 1.0, %v1507
        %v1509 = vrcp.pop %v1457
        %v1510 = vmul.f32 1.0, %v1509
        %v1511 = vrcp.pop %v1458
        %v1512 = vmul.f32 1.0, %v1511
        %v1513 = vrcp.pop %v1459
        %v1514 = vmul.f32 1.0, %v1513
        %v1515 = vrcp.pop %v1460
        %v1516 = vmul.f32 1.0, %v1515
        %v1517 = vrcp.pop %v1461
        %v1518 = vmul.f32 1.0, %v1517
        %v1519 = vrcp.pop %v1462
        %v1520 = vmul.f32 1.0, %v1519
        %v1521 = vrcp.pop %v1463
        %v1522 = vmul.f32 1.0, %v1521
        %v1523 = vrcp.pop %v1464
        %v1524 = vmul.f32 1.0, %v1523
        %v1525 = vrcp.pop %v1465
        %v1526 = vmul.f32 1.0, %v1525
        %v1527 = vrcp.pop %v1466
        %v1528 = vmul.f32 1.0, %v1527
        %v1529 = vrcp.pop %v1467
        %v1530 = vmul.f32 1.0, %v1529
        %v1531 = vrcp.pop %v1468
        %v1532 = vmul.f32 1.0, %v1531
        %v1533 = vpack.c.bf16 %v1472, %v1470
        %v1534 = vpack.c.bf16 %v1476, %v1474
        %v1535 = vpack.c.bf16 %v1480, %v1478
        %v1536 = vpack.c.bf16 %v1484, %v1482
        %v1537 = vpack.c.bf16 %v1488, %v1486
        %v1538 = vpack.c.bf16 %v1492, %v1490
        %v1539 = vpack.c.bf16 %v1496, %v1494
        %v1540 = vpack.c.bf16 %v1500, %v1498
        %v1541 = vpack.c.bf16 %v1504, %v1502
        %v1542 = vpack.c.bf16 %v1508, %v1506
        %v1543 = vpack.c.bf16 %v1512, %v1510
        %v1544 = vpack.c.bf16 %v1516, %v1514
        %v1545 = vpack.c.bf16 %v1520, %v1518
        %v1546 = vpack.c.bf16 %v1524, %v1522
        %v1547 = vpack.c.bf16 %v1528, %v1526
        %v1548 = vpack.c.bf16 %v1532, %v1530
        %v1549 = vld [vmem:[#allocation8] sm:$0xf]
        %v1550 = vld [vmem:[#allocation8 + $0x4] sm:$0xf]
        %v1551 = vld [vmem:[#allocation8 + $0x8] sm:$0xf]
        %v1552 = vld [vmem:[#allocation8 + $0xc] sm:$0xf]
        %v1553 = vld [vmem:[#allocation8 + $0x10] sm:$0xf]
        %v1554 = vld [vmem:[#allocation8 + $0x14] sm:$0xf]
        %v1555 = vld [vmem:[#allocation8 + $0x18] sm:$0xf]
        %v1556 = vld [vmem:[#allocation8 + $0x1c] sm:$0xf]
        %v1557 = vld [vmem:[#allocation8 + $0x20] sm:$0xf]
        %v1558 = vld [vmem:[#allocation8 + $0x24] sm:$0xf]
        %v1559 = vld [vmem:[#allocation8 + $0x28] sm:$0xf]
        %v1560 = vld [vmem:[#allocation8 + $0x2c] sm:$0xf]
        %v1561 = vld [vmem:[#allocation8 + $0x30] sm:$0xf]
        %v1562 = vld [vmem:[#allocation8 + $0x34] sm:$0xf]
        %v1563 = vld [vmem:[#allocation8 + $0x38] sm:$0xf]
        %v1564 = vld [vmem:[#allocation8 + $0x3c] sm:$0xf]
        %v1565 = vld [vmem:[%s6] sm:$0x1]
        %v1567 = vlaneseq
        %v1568 = vshrl.u32 %v1567, 7
        %v1569 = vsub.s32 0, %v1568
        %v1570 = vrot.slane %v1565, %v1569
        %v1588 = vunpack.c.l.b16 %v1549
        %v1589 = vunpack.c.l.b16 %v1550
        %v1590 = vunpack.c.l.b16 %v1551
        %v1591 = vunpack.c.l.b16 %v1552
        %v1592 = vunpack.c.l.b16 %v1553
        %v1593 = vunpack.c.l.b16 %v1554
        %v1594 = vunpack.c.l.b16 %v1555
        %v1595 = vunpack.c.l.b16 %v1556
        %v1596 = vunpack.c.l.b16 %v1557
        %v1597 = vunpack.c.l.b16 %v1558
        %v1598 = vunpack.c.l.b16 %v1559
        %v1599 = vunpack.c.l.b16 %v1560
        %v1600 = vunpack.c.l.b16 %v1561
        %v1601 = vunpack.c.l.b16 %v1562
        %v1602 = vunpack.c.l.b16 %v1563
        %v1603 = vunpack.c.l.b16 %v1564
        %v1604 = vpack.c.b16 %v1589, %v1588
        %v1605 = vpack.c.b16 %v1591, %v1590
        %v1606 = vpack.c.b16 %v1593, %v1592
        %v1607 = vpack.c.b16 %v1595, %v1594
        %v1608 = vpack.c.b16 %v1597, %v1596
        %v1609 = vpack.c.b16 %v1599, %v1598
        %v1610 = vpack.c.b16 %v1601, %v1600
        %v1611 = vpack.c.b16 %v1603, %v1602
        %1620 = vmatprep.subr.bf16.mxu0 0
        %1621 = vmatpush1.bf16.msra.mxu0 %v1604
        %1622 = vmatprep.subr.bf16.mxu0 0
        %1623 = vmatpush1.bf16.msra.mxu0 %v1605
        %1624 = vmatprep.subr.bf16.mxu0 0
        %1625 = vmatpush1.bf16.msra.mxu0 %v1606
        %1626 = vmatprep.subr.bf16.mxu0 0
        %1627 = vmatpush1.bf16.msra.mxu0 %v1607
        %1628 = vmatprep.subr.bf16.mxu0 0
        %1629 = vmatpush1.bf16.msra.mxu0 %v1608
        %1630 = vmatprep.subr.bf16.mxu0 0
        %1631 = vmatpush1.bf16.msra.mxu0 %v1609
        %1632 = vmatprep.subr.bf16.mxu0 0
        %1633 = vmatpush1.bf16.msra.mxu0 %v1610
        %1634 = vmatprep.subr.bf16.mxu0 0
        %1635 = vmatpush1.bf16.msra.mxu0 %v1611
        %1636 = vmatprep.subr.bf16.mxu0 0
        %1637 = vmatpush1.bf16.msra.mxu0 0
        %1638 = vmatprep.subr.bf16.mxu0 0
        %1639 = vmatpush1.bf16.msra.mxu0 0
        %1640 = vmatprep.subr.bf16.mxu0 0
        %1641 = vmatpush1.bf16.msra.mxu0 0
        %1642 = vmatprep.subr.bf16.mxu0 0
        %1643 = vmatpush1.bf16.msra.mxu0 0
        %1644 = vmatprep.subr.bf16.mxu0 0
        %1645 = vmatpush1.bf16.msra.mxu0 0
        %1646 = vmatprep.subr.bf16.mxu0 0
        %1647 = vmatpush1.bf16.msra.mxu0 0
        %1648 = vmatprep.subr.bf16.mxu0 0
        %1649 = vmatpush1.bf16.msra.mxu0 0
        %1650 = vmatprep.subr.bf16.mxu0 0
        %1651 = vmatpush1.bf16.msra.mxu0 0
        %1652 = vmatprep.mubr.bf16.mxu0 0
        %1653 = vmatmul.mubr.bf16.gmra.mrb[0].mxu0 %v1533
        %v1654 = vpop.f32.mrb[0].mxu0
        %v1655 = vadd.f32 %v1570, %v1654
        %v1656 = vpop.f32.mrb[0].mxu0
        %v1657 = vpop.f32.mrb[0].mxu0
        %v1658 = vadd.f32 %v1570, %v1657
        %v1659 = vpop.f32.mrb[0].mxu0
        %1660 = vmatprep.mubr.bf16.mxu0 0
        %1661 = vmatmul.mubr.bf16.gmra.mrb[0].mxu0 %v1534
        %v1662 = vpop.f32.mrb[0].mxu0
        %v1663 = vadd.f32 %v1570, %v1662
        %v1664 = vpop.f32.mrb[0].mxu0
        %v1665 = vpop.f32.mrb[0].mxu0
        %v1666 = vadd.f32 %v1570, %v1665
        %v1667 = vpop.f32.mrb[0].mxu0
        %1668 = vmatprep.mubr.bf16.mxu0 0
        %1669 = vmatmul.mubr.bf16.gmra.mrb[0].mxu0 %v1535
        %v1670 = vpop.f32.mrb[0].mxu0
        %v1671 = vadd.f32 %v1570, %v1670
        %v1672 = vpop.f32.mrb[0].mxu0
        %v1673 = vpop.f32.mrb[0].mxu0
        %v1674 = vadd.f32 %v1570, %v1673
        %v1675 = vpop.f32.mrb[0].mxu0
        %1676 = vmatprep.mubr.bf16.mxu0 0
        %1677 = vmatmul.mubr.bf16.gmra.mrb[0].mxu0 %v1536
        %v1678 = vpop.f32.mrb[0].mxu0
        %v1679 = vadd.f32 %v1570, %v1678
        %v1680 = vpop.f32.mrb[0].mxu0
        %v1681 = vpop.f32.mrb[0].mxu0
        %v1682 = vadd.f32 %v1570, %v1681
        %v1683 = vpop.f32.mrb[0].mxu0
        %1684 = vmatprep.mubr.bf16.mxu0 0
        %1685 = vmatmul.mubr.bf16.gmra.mrb[0].mxu0 %v1537
        %v1686 = vpop.f32.mrb[0].mxu0
        %v1687 = vadd.f32 %v1570, %v1686
        %v1688 = vpop.f32.mrb[0].mxu0
        %v1689 = vpop.f32.mrb[0].mxu0
        %v1690 = vadd.f32 %v1570, %v1689
        %v1691 = vpop.f32.mrb[0].mxu0
        %1692 = vmatprep.mubr.bf16.mxu0 0
        %1693 = vmatmul.mubr.bf16.gmra.mrb[0].mxu0 %v1538
        %v1694 = vpop.f32.mrb[0].mxu0
        %v1695 = vadd.f32 %v1570, %v1694
        %v1696 = vpop.f32.mrb[0].mxu0
        %v1697 = vpop.f32.mrb[0].mxu0
        %v1698 = vadd.f32 %v1570, %v1697
        %v1699 = vpop.f32.mrb[0].mxu0
        %1700 = vmatprep.mubr.bf16.mxu0 0
        %1701 = vmatmul.mubr.bf16.gmra.mrb[0].mxu0 %v1539
        %v1702 = vpop.f32.mrb[0].mxu0
        %v1703 = vadd.f32 %v1570, %v1702
        %v1704 = vpop.f32.mrb[0].mxu0
        %v1705 = vpop.f32.mrb[0].mxu0
        %v1706 = vadd.f32 %v1570, %v1705
        %v1707 = vpop.f32.mrb[0].mxu0
        %1708 = vmatprep.mubr.bf16.mxu0 0
        %1709 = vmatmul.mubr.bf16.gmra.mrb[0].mxu0 %v1540
        %v1710 = vpop.f32.mrb[0].mxu0
        %v1711 = vadd.f32 %v1570, %v1710
        %v1712 = vpop.f32.mrb[0].mxu0
        %v1713 = vpop.f32.mrb[0].mxu0
        %v1714 = vadd.f32 %v1570, %v1713
        %v1715 = vpop.f32.mrb[0].mxu0
        %1716 = vmatprep.mubr.bf16.mxu0 0
        %1717 = vmatmul.mubr.bf16.gmra.mrb[0].mxu0 %v1541
        %v1718 = vpop.f32.mrb[0].mxu0
        %v1719 = vadd.f32 %v1570, %v1718
        %v1720 = vpop.f32.mrb[0].mxu0
        %v1721 = vpop.f32.mrb[0].mxu0
        %v1722 = vadd.f32 %v1570, %v1721
        %v1723 = vpop.f32.mrb[0].mxu0
        %1724 = vmatprep.mubr.bf16.mxu0 0
        %1725 = vmatmul.mubr.bf16.gmra.mrb[0].mxu0 %v1542
        %v1726 = vpop.f32.mrb[0].mxu0
        %v1727 = vadd.f32 %v1570, %v1726
        %v1728 = vpop.f32.mrb[0].mxu0
        %v1729 = vpop.f32.mrb[0].mxu0
        %v1730 = vadd.f32 %v1570, %v1729
        %v1731 = vpop.f32.mrb[0].mxu0
        %1732 = vmatprep.mubr.bf16.mxu0 0
        %1733 = vmatmul.mubr.bf16.gmra.mrb[0].mxu0 %v1543
        %v1734 = vpop.f32.mrb[0].mxu0
        %v1735 = vadd.f32 %v1570, %v1734
        %v1736 = vpop.f32.mrb[0].mxu0
        %v1737 = vpop.f32.mrb[0].mxu0
        %v1738 = vadd.f32 %v1570, %v1737
        %v1739 = vpop.f32.mrb[0].mxu0
        %1740 = vmatprep.mubr.bf16.mxu0 0
        %1741 = vmatmul.mubr.bf16.gmra.mrb[0].mxu0 %v1544
        %v1742 = vpop.f32.mrb[0].mxu0
        %v1743 = vadd.f32 %v1570, %v1742
        %v1744 = vpop.f32.mrb[0].mxu0
        %v1745 = vpop.f32.mrb[0].mxu0
        %v1746 = vadd.f32 %v1570, %v1745
        %v1747 = vpop.f32.mrb[0].mxu0
        %1748 = vmatprep.mubr.bf16.mxu0 0
        %1749 = vmatmul.mubr.bf16.gmra.mrb[0].mxu0 %v1545
        %v1750 = vpop.f32.mrb[0].mxu0
        %v1751 = vadd.f32 %v1570, %v1750
        %v1752 = vpop.f32.mrb[0].mxu0
        %v1753 = vpop.f32.mrb[0].mxu0
        %v1754 = vadd.f32 %v1570, %v1753
        %v1755 = vpop.f32.mrb[0].mxu0
        %1756 = vmatprep.mubr.bf16.mxu0 0
        %1757 = vmatmul.mubr.bf16.gmra.mrb[0].mxu0 %v1546
        %v1758 = vpop.f32.mrb[0].mxu0
        %v1759 = vadd.f32 %v1570, %v1758
        %v1760 = vpop.f32.mrb[0].mxu0
        %v1761 = vpop.f32.mrb[0].mxu0
        %v1762 = vadd.f32 %v1570, %v1761
        %v1763 = vpop.f32.mrb[0].mxu0
        %1764 = vmatprep.mubr.bf16.mxu0 0
        %1765 = vmatmul.mubr.bf16.gmra.mrb[0].mxu0 %v1547
        %v1766 = vpop.f32.mrb[0].mxu0
        %v1767 = vadd.f32 %v1570, %v1766
        %v1768 = vpop.f32.mrb[0].mxu0
        %v1769 = vpop.f32.mrb[0].mxu0
        %v1770 = vadd.f32 %v1570, %v1769
        %v1771 = vpop.f32.mrb[0].mxu0
        %1772 = vmatprep.mubr.bf16.mxu0 0
        %1773 = vmatmul.mubr.bf16.gmra.mrb[0].mxu0 %v1548
        %v1774 = vpop.f32.mrb[0].mxu0
        %v1775 = vadd.f32 %v1570, %v1774
        %v1776 = vpop.f32.mrb[0].mxu0
        %v1777 = vpop.f32.mrb[0].mxu0
        %v1778 = vadd.f32 %v1570, %v1777
        %v1779 = vpop.f32.mrb[0].mxu0
        %1780 = vdwg.mxu0
        %v1781 = vxor.u32 %v1655, 2147483648
        %v1782 = vxor.u32 %v1658, 2147483648
        %v1783 = vxor.u32 %v1663, 2147483648
        %v1784 = vxor.u32 %v1666, 2147483648
        %v1785 = vxor.u32 %v1671, 2147483648
        %v1786 = vxor.u32 %v1674, 2147483648
        %v1787 = vxor.u32 %v1679, 2147483648
        %v1788 = vxor.u32 %v1682, 2147483648
        %v1789 = vxor.u32 %v1687, 2147483648
        %v1790 = vxor.u32 %v1690, 2147483648
        %v1791 = vxor.u32 %v1695, 2147483648
        %v1792 = vxor.u32 %v1698, 2147483648
        %v1793 = vxor.u32 %v1703, 2147483648
        %v1794 = vxor.u32 %v1706, 2147483648
        %v1795 = vxor.u32 %v1711, 2147483648
        %v1796 = vxor.u32 %v1714, 2147483648
        %v1797 = vxor.u32 %v1719, 2147483648
        %v1798 = vxor.u32 %v1722, 2147483648
        %v1799 = vxor.u32 %v1727, 2147483648
        %v1800 = vxor.u32 %v1730, 2147483648
        %v1801 = vxor.u32 %v1735, 2147483648
        %v1802 = vxor.u32 %v1738, 2147483648
        %v1803 = vxor.u32 %v1743, 2147483648
        %v1804 = vxor.u32 %v1746, 2147483648
        %v1805 = vxor.u32 %v1751, 2147483648
        %v1806 = vxor.u32 %v1754, 2147483648
        %v1807 = vxor.u32 %v1759, 2147483648
        %v1808 = vxor.u32 %v1762, 2147483648
        %v1809 = vxor.u32 %v1767, 2147483648
        %v1810 = vxor.u32 %v1770, 2147483648
        %v1811 = vxor.u32 %v1775, 2147483648
        %v1812 = vxor.u32 %v1778, 2147483648
        %v1813 = vmul.f32 %v1781, 1.442695
        %v1814 = vpow.pop %v1813
        %v1815 = vmul.f32 %v1782, 1.442695
        %v1816 = vpow.pop %v1815
        %v1817 = vmul.f32 %v1783, 1.442695
        %v1818 = vpow.pop %v1817
        %v1819 = vmul.f32 %v1784, 1.442695
        %v1820 = vpow.pop %v1819
        %v1821 = vmul.f32 %v1785, 1.442695
        %v1822 = vpow.pop %v1821
        %v1823 = vmul.f32 %v1786, 1.442695
        %v1824 = vpow.pop %v1823
        %v1825 = vmul.f32 %v1787, 1.442695
        %v1826 = vpow.pop %v1825
        %v1827 = vmul.f32 %v1788, 1.442695
        %v1828 = vpow.pop %v1827
        %v1829 = vmul.f32 %v1789, 1.442695
        %v1830 = vpow.pop %v1829
        %v1831 = vmul.f32 %v1790, 1.442695
        %v1832 = vpow.pop %v1831
        %v1833 = vmul.f32 %v1791, 1.442695
        %v1834 = vpow.pop %v1833
        %v1835 = vmul.f32 %v1792, 1.442695
        %v1836 = vpow.pop %v1835
        %v1837 = vmul.f32 %v1793, 1.442695
        %v1838 = vpow.pop %v1837
        %v1839 = vmul.f32 %v1794, 1.442695
        %v1840 = vpow.pop %v1839
        %v1841 = vmul.f32 %v1795, 1.442695
        %v1842 = vpow.pop %v1841
        %v1843 = vmul.f32 %v1796, 1.442695
        %v1844 = vpow.pop %v1843
        %v1845 = vmul.f32 %v1797, 1.442695
        %v1846 = vpow.pop %v1845
        %v1847 = vmul.f32 %v1798, 1.442695
        %v1848 = vpow.pop %v1847
        %v1849 = vmul.f32 %v1799, 1.442695
        %v1850 = vpow.pop %v1849
        %v1851 = vmul.f32 %v1800, 1.442695
        %v1852 = vpow.pop %v1851
        %v1853 = vmul.f32 %v1801, 1.442695
        %v1854 = vpow.pop %v1853
        %v1855 = vmul.f32 %v1802, 1.442695
        %v1856 = vpow.pop %v1855
        %v1857 = vmul.f32 %v1803, 1.442695
        %v1858 = vpow.pop %v1857
        %v1859 = vmul.f32 %v1804, 1.442695
        %v1860 = vpow.pop %v1859
        %v1861 = vmul.f32 %v1805, 1.442695
        %v1862 = vpow.pop %v1861
        %v1863 = vmul.f32 %v1806, 1.442695
        %v1864 = vpow.pop %v1863
        %v1865 = vmul.f32 %v1807, 1.442695
        %v1866 = vpow.pop %v1865
        %v1867 = vmul.f32 %v1808, 1.442695
        %v1868 = vpow.pop %v1867
        %v1869 = vmul.f32 %v1809, 1.442695
        %v1870 = vpow.pop %v1869
        %v1871 = vmul.f32 %v1810, 1.442695
        %v1872 = vpow.pop %v1871
        %v1873 = vmul.f32 %v1811, 1.442695
        %v1874 = vpow.pop %v1873
        %v1875 = vmul.f32 %v1812, 1.442695
        %v1876 = vpow.pop %v1875
        %v1877 = vadd.f32 %v1814, 1.0
        %v1878 = vadd.f32 %v1816, 1.0
        %v1879 = vadd.f32 %v1818, 1.0
        %v1880 = vadd.f32 %v1820, 1.0
        %v1881 = vadd.f32 %v1822, 1.0
        %v1882 = vadd.f32 %v1824, 1.0
        %v1883 = vadd.f32 %v1826, 1.0
        %v1884 = vadd.f32 %v1828, 1.0
        %v1885 = vadd.f32 %v1830, 1.0
        %v1886 = vadd.f32 %v1832, 1.0
        %v1887 = vadd.f32 %v1834, 1.0
        %v1888 = vadd.f32 %v1836, 1.0
        %v1889 = vadd.f32 %v1838, 1.0
        %v1890 = vadd.f32 %v1840, 1.0
        %v1891 = vadd.f32 %v1842, 1.0
        %v1892 = vadd.f32 %v1844, 1.0
        %v1893 = vadd.f32 %v1846, 1.0
        %v1894 = vadd.f32 %v1848, 1.0
        %v1895 = vadd.f32 %v1850, 1.0
        %v1896 = vadd.f32 %v1852, 1.0
        %v1897 = vadd.f32 %v1854, 1.0
        %v1898 = vadd.f32 %v1856, 1.0
        %v1899 = vadd.f32 %v1858, 1.0
        %v1900 = vadd.f32 %v1860, 1.0
        %v1901 = vadd.f32 %v1862, 1.0
        %v1902 = vadd.f32 %v1864, 1.0
        %v1903 = vadd.f32 %v1866, 1.0
        %v1904 = vadd.f32 %v1868, 1.0
        %v1905 = vadd.f32 %v1870, 1.0
        %v1906 = vadd.f32 %v1872, 1.0
        %v1907 = vadd.f32 %v1874, 1.0
        %v1908 = vadd.f32 %v1876, 1.0
        %v1909 = vrcp.pop %v1877
        %v1910 = vmul.f32 1.0, %v1909
        %v1911 = vrcp.pop %v1878
        %v1912 = vmul.f32 1.0, %v1911
        %v1913 = vrcp.pop %v1879
        %v1914 = vmul.f32 1.0, %v1913
        %v1915 = vrcp.pop %v1880
        %v1916 = vmul.f32 1.0, %v1915
        %v1917 = vrcp.pop %v1881
        %v1918 = vmul.f32 1.0, %v1917
        %v1919 = vrcp.pop %v1882
        %v1920 = vmul.f32 1.0, %v1919
        %v1921 = vrcp.pop %v1883
        %v1922 = vmul.f32 1.0, %v1921
        %v1923 = vrcp.pop %v1884
        %v1924 = vmul.f32 1.0, %v1923
        %v1925 = vrcp.pop %v1885
        %v1926 = vmul.f32 1.0, %v1925
        %v1927 = vrcp.pop %v1886
        %v1928 = vmul.f32 1.0, %v1927
        %v1929 = vrcp.pop %v1887
        %v1930 = vmul.f32 1.0, %v1929
        %v1931 = vrcp.pop %v1888
        %v1932 = vmul.f32 1.0, %v1931
        %v1933 = vrcp.pop %v1889
        %v1934 = vmul.f32 1.0, %v1933
        %v1935 = vrcp.pop %v1890
        %v1936 = vmul.f32 1.0, %v1935
        %v1937 = vrcp.pop %v1891
        %v1938 = vmul.f32 1.0, %v1937
        %v1939 = vrcp.pop %v1892
        %v1940 = vmul.f32 1.0, %v1939
        %v1941 = vrcp.pop %v1893
        %v1942 = vmul.f32 1.0, %v1941
        %v1943 = vrcp.pop %v1894
        %v1944 = vmul.f32 1.0, %v1943
        %v1945 = vrcp.pop %v1895
        %v1946 = vmul.f32 1.0, %v1945
        %v1947 = vrcp.pop %v1896
        %v1948 = vmul.f32 1.0, %v1947
        %v1949 = vrcp.pop %v1897
        %v1950 = vmul.f32 1.0, %v1949
        %v1951 = vrcp.pop %v1898
        %v1952 = vmul.f32 1.0, %v1951
        %v1953 = vrcp.pop %v1899
        %v1954 = vmul.f32 1.0, %v1953
        %v1955 = vrcp.pop %v1900
        %v1956 = vmul.f32 1.0, %v1955
        %v1957 = vrcp.pop %v1901
        %v1958 = vmul.f32 1.0, %v1957
        %v1959 = vrcp.pop %v1902
        %v1960 = vmul.f32 1.0, %v1959
        %v1961 = vrcp.pop %v1903
        %v1962 = vmul.f32 1.0, %v1961
        %v1963 = vrcp.pop %v1904
        %v1964 = vmul.f32 1.0, %v1963
        %v1965 = vrcp.pop %v1905
        %v1966 = vmul.f32 1.0, %v1965
        %v1967 = vrcp.pop %v1906
        %v1968 = vmul.f32 1.0, %v1967
        %v1969 = vrcp.pop %v1907
        %v1970 = vmul.f32 1.0, %v1969
        %v1971 = vrcp.pop %v1908
        %v1972 = vmul.f32 1.0, %v1971
        %v1973 = vpack.c.bf16 %v1912, %v1910
        %v1974 = vpack.c.bf16 %v1916, %v1914
        %v1975 = vpack.c.bf16 %v1920, %v1918
        %v1976 = vpack.c.bf16 %v1924, %v1922
        %v1977 = vpack.c.bf16 %v1928, %v1926
        %v1978 = vpack.c.bf16 %v1932, %v1930
        %v1979 = vpack.c.bf16 %v1936, %v1934
        %v1980 = vpack.c.bf16 %v1940, %v1938
        %v1981 = vpack.c.bf16 %v1944, %v1942
        %v1982 = vpack.c.bf16 %v1948, %v1946
        %v1983 = vpack.c.bf16 %v1952, %v1950
        %v1984 = vpack.c.bf16 %v1956, %v1954
        %v1985 = vpack.c.bf16 %v1960, %v1958
        %v1986 = vpack.c.bf16 %v1964, %v1962
        %v1987 = vpack.c.bf16 %v1968, %v1966
        %v1988 = vpack.c.bf16 %v1972, %v1970
        %v1989 = vld [vmem:[#allocation10] sm:$0xff]
        %v1990 = vld [vmem:[#allocation10 + $0x8] sm:$0xff]
        %v1991 = vld [vmem:[#allocation10 + $0x10] sm:$0xff]
        %v1992 = vld [vmem:[#allocation10 + $0x18] sm:$0xff]
        %v1993 = vld [vmem:[#allocation10 + $0x20] sm:$0xff]
        %v1994 = vld [vmem:[#allocation10 + $0x28] sm:$0xff]
        %v1995 = vld [vmem:[#allocation10 + $0x30] sm:$0xff]
        %v1996 = vld [vmem:[#allocation10 + $0x38] sm:$0xff]
        %v1997 = vld [vmem:[#allocation10 + $0x40] sm:$0xff]
        %v1998 = vld [vmem:[#allocation10 + $0x48] sm:$0xff]
        %v1999 = vld [vmem:[#allocation10 + $0x50] sm:$0xff]
        %v2000 = vld [vmem:[#allocation10 + $0x58] sm:$0xff]
        %v2001 = vld [vmem:[#allocation10 + $0x60] sm:$0xff]
        %v2002 = vld [vmem:[#allocation10 + $0x68] sm:$0xff]
        %v2003 = vld [vmem:[#allocation10 + $0x70] sm:$0xff]
        %v2004 = vld [vmem:[#allocation10 + $0x78] sm:$0xff]
        %v2005 = vld [vmem:[%s8] sm:$0x3]
        %v2007 = vlaneseq
        %v2008 = vshrl.u32 %v2007, 7
        %v2009 = vsub.s32 0, %v2008
        %v2010 = vrot.slane %v2005, %v2009
        %v2011 = vlaneseq
        %v2012 = vshrl.u32 %v2011, 7
        %v2013 = vsub.s32 1, %v2012
        %v2014 = vrot.slane %v2005, %v2013
        %v2033 = vunpack.c.l.b16 %v1989
        %v2034 = vunpack.c.h.b16 %v1989
        %v2035 = vunpack.c.l.b16 %v1990
        %v2036 = vunpack.c.h.b16 %v1990
        %v2037 = vunpack.c.l.b16 %v1991
        %v2038 = vunpack.c.h.b16 %v1991
        %v2039 = vunpack.c.l.b16 %v1992
        %v2040 = vunpack.c.h.b16 %v1992
        %v2041 = vunpack.c.l.b16 %v1993
        %v2042 = vunpack.c.h.b16 %v1993
        %v2043 = vunpack.c.l.b16 %v1994
        %v2044 = vunpack.c.h.b16 %v1994
        %v2045 = vunpack.c.l.b16 %v1995
        %v2046 = vunpack.c.h.b16 %v1995
        %v2047 = vunpack.c.l.b16 %v1996
        %v2048 = vunpack.c.h.b16 %v1996
        %v2049 = vunpack.c.l.b16 %v1997
        %v2050 = vunpack.c.h.b16 %v1997
        %v2051 = vunpack.c.l.b16 %v1998
        %v2052 = vunpack.c.h.b16 %v1998
        %v2053 = vunpack.c.l.b16 %v1999
        %v2054 = vunpack.c.h.b16 %v1999
        %v2055 = vunpack.c.l.b16 %v2000
        %v2056 = vunpack.c.h.b16 %v2000
        %v2057 = vunpack.c.l.b16 %v2001
        %v2058 = vunpack.c.h.b16 %v2001
        %v2059 = vunpack.c.l.b16 %v2002
        %v2060 = vunpack.c.h.b16 %v2002
        %v2061 = vunpack.c.l.b16 %v2003
        %v2062 = vunpack.c.h.b16 %v2003
        %v2063 = vunpack.c.l.b16 %v2004
        %v2064 = vunpack.c.h.b16 %v2004
        %v2065 = vpack.c.b16 %v2035, %v2033
        %v2066 = vpack.c.b16 %v2036, %v2034
        %v2067 = vpack.c.b16 %v2039, %v2037
        %v2068 = vpack.c.b16 %v2040, %v2038
        %v2069 = vpack.c.b16 %v2043, %v2041
        %v2070 = vpack.c.b16 %v2044, %v2042
        %v2071 = vpack.c.b16 %v2047, %v2045
        %v2072 = vpack.c.b16 %v2048, %v2046
        %v2073 = vpack.c.b16 %v2051, %v2049
        %v2074 = vpack.c.b16 %v2052, %v2050
        %v2075 = vpack.c.b16 %v2055, %v2053
        %v2076 = vpack.c.b16 %v2056, %v2054
        %v2077 = vpack.c.b16 %v2059, %v2057
        %v2078 = vpack.c.b16 %v2060, %v2058
        %v2079 = vpack.c.b16 %v2063, %v2061
        %v2080 = vpack.c.b16 %v2064, %v2062
        %2097 = vmatprep.subr.bf16.mxu0 %v2066
        %2098 = vmatpush1.bf16.msra.mxu0 %v2065
        %2099 = vmatprep.subr.bf16.mxu0 %v2068
        %2100 = vmatpush1.bf16.msra.mxu0 %v2067
        %2101 = vmatprep.subr.bf16.mxu0 %v2070
        %2102 = vmatpush1.bf16.msra.mxu0 %v2069
        %2103 = vmatprep.subr.bf16.mxu0 %v2072
        %2104 = vmatpush1.bf16.msra.mxu0 %v2071
        %2105 = vmatprep.subr.bf16.mxu0 %v2074
        %2106 = vmatpush1.bf16.msra.mxu0 %v2073
        %2107 = vmatprep.subr.bf16.mxu0 %v2076
        %2108 = vmatpush1.bf16.msra.mxu0 %v2075
        %2109 = vmatprep.subr.bf16.mxu0 %v2078
        %2110 = vmatpush1.bf16.msra.mxu0 %v2077
        %2111 = vmatprep.subr.bf16.mxu0 %v2080
        %2112 = vmatpush1.bf16.msra.mxu0 %v2079
        %2113 = vmatprep.subr.bf16.mxu0 0
        %2114 = vmatpush1.bf16.msra.mxu0 0
        %2115 = vmatprep.subr.bf16.mxu0 0
        %2116 = vmatpush1.bf16.msra.mxu0 0
        %2117 = vmatprep.subr.bf16.mxu0 0
        %2118 = vmatpush1.bf16.msra.mxu0 0
        %2119 = vmatprep.subr.bf16.mxu0 0
        %2120 = vmatpush1.bf16.msra.mxu0 0
        %2121 = vmatprep.subr.bf16.mxu0 0
        %2122 = vmatpush1.bf16.msra.mxu0 0
        %2123 = vmatprep.subr.bf16.mxu0 0
        %2124 = vmatpush1.bf16.msra.mxu0 0
        %2125 = vmatprep.subr.bf16.mxu0 0
        %2126 = vmatpush1.bf16.msra.mxu0 0
        %2127 = vmatprep.subr.bf16.mxu0 0
        %2128 = vmatpush1.bf16.msra.mxu0 0
        %2129 = vmatprep.mubr.bf16.mxu0 0
        %2130 = vmatmul.mubr.bf16.gmra.mrb[0].mxu0 %v1973
        %v2131 = vpop.f32.mrb[0].mxu0
        %v2132 = vadd.f32 %v2010, %v2131
        %v2133 = vpop.f32.mrb[0].mxu0
        %v2134 = vadd.f32 %v2014, %v2133
        %v2135 = vpop.f32.mrb[0].mxu0
        %v2136 = vadd.f32 %v2010, %v2135
        %v2137 = vpop.f32.mrb[0].mxu0
        %v2138 = vadd.f32 %v2014, %v2137
        %2139 = vmatprep.mubr.bf16.mxu0 0
        %2140 = vmatmul.mubr.bf16.gmra.mrb[0].mxu0 %v1974
        %v2141 = vpop.f32.mrb[0].mxu0
        %v2142 = vadd.f32 %v2010, %v2141
        %v2143 = vpop.f32.mrb[0].mxu0
        %v2144 = vadd.f32 %v2014, %v2143
        %v2145 = vpop.f32.mrb[0].mxu0
        %v2146 = vadd.f32 %v2010, %v2145
        %v2147 = vpop.f32.mrb[0].mxu0
        %v2148 = vadd.f32 %v2014, %v2147
        %2149 = vmatprep.mubr.bf16.mxu0 0
        %2150 = vmatmul.mubr.bf16.gmra.mrb[0].mxu0 %v1975
        %v2151 = vpop.f32.mrb[0].mxu0
        %v2152 = vadd.f32 %v2010, %v2151
        %v2153 = vpop.f32.mrb[0].mxu0
        %v2154 = vadd.f32 %v2014, %v2153
        %v2155 = vpop.f32.mrb[0].mxu0
        %v2156 = vadd.f32 %v2010, %v2155
        %v2157 = vpop.f32.mrb[0].mxu0
        %v2158 = vadd.f32 %v2014, %v2157
        %2159 = vmatprep.mubr.bf16.mxu0 0
        %2160 = vmatmul.mubr.bf16.gmra.mrb[0].mxu0 %v1976
        %v2161 = vpop.f32.mrb[0].mxu0
        %v2162 = vadd.f32 %v2010, %v2161
        %v2163 = vpop.f32.mrb[0].mxu0
        %v2164 = vadd.f32 %v2014, %v2163
        %v2165 = vpop.f32.mrb[0].mxu0
        %v2166 = vadd.f32 %v2010, %v2165
        %v2167 = vpop.f32.mrb[0].mxu0
        %v2168 = vadd.f32 %v2014, %v2167
        %2169 = vmatprep.mubr.bf16.mxu0 0
        %2170 = vmatmul.mubr.bf16.gmra.mrb[0].mxu0 %v1977
        %v2171 = vpop.f32.mrb[0].mxu0
        %v2172 = vadd.f32 %v2010, %v2171
        %v2173 = vpop.f32.mrb[0].mxu0
        %v2174 = vadd.f32 %v2014, %v2173
        %v2175 = vpop.f32.mrb[0].mxu0
        %v2176 = vadd.f32 %v2010, %v2175
        %v2177 = vpop.f32.mrb[0].mxu0
        %v2178 = vadd.f32 %v2014, %v2177
        %2179 = vmatprep.mubr.bf16.mxu0 0
        %2180 = vmatmul.mubr.bf16.gmra.mrb[0].mxu0 %v1978
        %v2181 = vpop.f32.mrb[0].mxu0
        %v2182 = vadd.f32 %v2010, %v2181
        %v2183 = vpop.f32.mrb[0].mxu0
        %v2184 = vadd.f32 %v2014, %v2183
        %v2185 = vpop.f32.mrb[0].mxu0
        %v2186 = vadd.f32 %v2010, %v2185
        %v2187 = vpop.f32.mrb[0].mxu0
        %v2188 = vadd.f32 %v2014, %v2187
        %2189 = vmatprep.mubr.bf16.mxu0 0
        %2190 = vmatmul.mubr.bf16.gmra.mrb[0].mxu0 %v1979
        %v2191 = vpop.f32.mrb[0].mxu0
        %v2192 = vadd.f32 %v2010, %v2191
        %v2193 = vpop.f32.mrb[0].mxu0
        %v2194 = vadd.f32 %v2014, %v2193
        %v2195 = vpop.f32.mrb[0].mxu0
        %v2196 = vadd.f32 %v2010, %v2195
        %v2197 = vpop.f32.mrb[0].mxu0
        %v2198 = vadd.f32 %v2014, %v2197
        %2199 = vmatprep.mubr.bf16.mxu0 0
        %2200 = vmatmul.mubr.bf16.gmra.mrb[0].mxu0 %v1980
        %v2201 = vpop.f32.mrb[0].mxu0
        %v2202 = vadd.f32 %v2010, %v2201
        %v2203 = vpop.f32.mrb[0].mxu0
        %v2204 = vadd.f32 %v2014, %v2203
        %v2205 = vpop.f32.mrb[0].mxu0
        %v2206 = vadd.f32 %v2010, %v2205
        %v2207 = vpop.f32.mrb[0].mxu0
        %v2208 = vadd.f32 %v2014, %v2207
        %2209 = vmatprep.mubr.bf16.mxu0 0
        %2210 = vmatmul.mubr.bf16.gmra.mrb[0].mxu0 %v1981
        %v2211 = vpop.f32.mrb[0].mxu0
        %v2212 = vadd.f32 %v2010, %v2211
        %v2213 = vpop.f32.mrb[0].mxu0
        %v2214 = vadd.f32 %v2014, %v2213
        %v2215 = vpop.f32.mrb[0].mxu0
        %v2216 = vadd.f32 %v2010, %v2215
        %v2217 = vpop.f32.mrb[0].mxu0
        %v2218 = vadd.f32 %v2014, %v2217
        %2219 = vmatprep.mubr.bf16.mxu0 0
        %2220 = vmatmul.mubr.bf16.gmra.mrb[0].mxu0 %v1982
        %v2221 = vpop.f32.mrb[0].mxu0
        %v2222 = vadd.f32 %v2010, %v2221
        %v2223 = vpop.f32.mrb[0].mxu0
        %v2224 = vadd.f32 %v2014, %v2223
        %v2225 = vpop.f32.mrb[0].mxu0
        %v2226 = vadd.f32 %v2010, %v2225
        %v2227 = vpop.f32.mrb[0].mxu0
        %v2228 = vadd.f32 %v2014, %v2227
        %2229 = vmatprep.mubr.bf16.mxu0 0
        %2230 = vmatmul.mubr.bf16.gmra.mrb[0].mxu0 %v1983
        %v2231 = vpop.f32.mrb[0].mxu0
        %v2232 = vadd.f32 %v2010, %v2231
        %v2233 = vpop.f32.mrb[0].mxu0
        %v2234 = vadd.f32 %v2014, %v2233
        %v2235 = vpop.f32.mrb[0].mxu0
        %v2236 = vadd.f32 %v2010, %v2235
        %v2237 = vpop.f32.mrb[0].mxu0
        %v2238 = vadd.f32 %v2014, %v2237
        %2239 = vmatprep.mubr.bf16.mxu0 0
        %2240 = vmatmul.mubr.bf16.gmra.mrb[0].mxu0 %v1984
        %v2241 = vpop.f32.mrb[0].mxu0
        %v2242 = vadd.f32 %v2010, %v2241
        %v2243 = vpop.f32.mrb[0].mxu0
        %v2244 = vadd.f32 %v2014, %v2243
        %v2245 = vpop.f32.mrb[0].mxu0
        %v2246 = vadd.f32 %v2010, %v2245
        %v2247 = vpop.f32.mrb[0].mxu0
        %v2248 = vadd.f32 %v2014, %v2247
        %2249 = vmatprep.mubr.bf16.mxu0 0
        %2250 = vmatmul.mubr.bf16.gmra.mrb[0].mxu0 %v1985
        %v2251 = vpop.f32.mrb[0].mxu0
        %v2252 = vadd.f32 %v2010, %v2251
        %v2253 = vpop.f32.mrb[0].mxu0
        %v2254 = vadd.f32 %v2014, %v2253
        %v2255 = vpop.f32.mrb[0].mxu0
        %v2256 = vadd.f32 %v2010, %v2255
        %v2257 = vpop.f32.mrb[0].mxu0
        %v2258 = vadd.f32 %v2014, %v2257
        %2259 = vmatprep.mubr.bf16.mxu0 0
        %2260 = vmatmul.mubr.bf16.gmra.mrb[0].mxu0 %v1986
        %v2261 = vpop.f32.mrb[0].mxu0
        %v2262 = vadd.f32 %v2010, %v2261
        %v2263 = vpop.f32.mrb[0].mxu0
        %v2264 = vadd.f32 %v2014, %v2263
        %v2265 = vpop.f32.mrb[0].mxu0
        %v2266 = vadd.f32 %v2010, %v2265
        %v2267 = vpop.f32.mrb[0].mxu0
        %v2268 = vadd.f32 %v2014, %v2267
        %2269 = vmatprep.mubr.bf16.mxu0 0
        %2270 = vmatmul.mubr.bf16.gmra.mrb[0].mxu0 %v1987
        %v2271 = vpop.f32.mrb[0].mxu0
        %v2272 = vadd.f32 %v2010, %v2271
        %v2273 = vpop.f32.mrb[0].mxu0
        %v2274 = vadd.f32 %v2014, %v2273
        %v2275 = vpop.f32.mrb[0].mxu0
        %v2276 = vadd.f32 %v2010, %v2275
        %v2277 = vpop.f32.mrb[0].mxu0
        %v2278 = vadd.f32 %v2014, %v2277
        %2279 = vmatprep.mubr.bf16.mxu0 0
        %2280 = vmatmul.mubr.bf16.gmra.mrb[0].mxu0 %v1988
        %v2281 = vpop.f32.mrb[0].mxu0
        %v2282 = vadd.f32 %v2010, %v2281
        %v2283 = vpop.f32.mrb[0].mxu0
        %v2284 = vadd.f32 %v2014, %v2283
        %v2285 = vpop.f32.mrb[0].mxu0
        %v2286 = vadd.f32 %v2010, %v2285
        %v2287 = vpop.f32.mrb[0].mxu0
        %v2288 = vadd.f32 %v2014, %v2287
        %2289 = vdwg.mxu0
        %v2290 = vpack.c.bf16 %v2136, %v2132
        %v2291 = vpack.c.bf16 %v2138, %v2134
        %v2292 = vpack.c.bf16 %v2146, %v2142
        %v2293 = vpack.c.bf16 %v2148, %v2144
        %v2294 = vpack.c.bf16 %v2156, %v2152
        %v2295 = vpack.c.bf16 %v2158, %v2154
        %v2296 = vpack.c.bf16 %v2166, %v2162
        %v2297 = vpack.c.bf16 %v2168, %v2164
        %v2298 = vpack.c.bf16 %v2176, %v2172
        %v2299 = vpack.c.bf16 %v2178, %v2174
        %v2300 = vpack.c.bf16 %v2186, %v2182
        %v2301 = vpack.c.bf16 %v2188, %v2184
        %v2302 = vpack.c.bf16 %v2196, %v2192
        %v2303 = vpack.c.bf16 %v2198, %v2194
        %v2304 = vpack.c.bf16 %v2206, %v2202
        %v2305 = vpack.c.bf16 %v2208, %v2204
        %v2306 = vpack.c.bf16 %v2216, %v2212
        %v2307 = vpack.c.bf16 %v2218, %v2214
        %v2308 = vpack.c.bf16 %v2226, %v2222
        %v2309 = vpack.c.bf16 %v2228, %v2224
        %v2310 = vpack.c.bf16 %v2236, %v2232
        %v2311 = vpack.c.bf16 %v2238, %v2234
        %v2312 = vpack.c.bf16 %v2246, %v2242
        %v2313 = vpack.c.bf16 %v2248, %v2244
        %v2314 = vpack.c.bf16 %v2256, %v2252
        %v2315 = vpack.c.bf16 %v2258, %v2254
        %v2316 = vpack.c.bf16 %v2266, %v2262
        %v2317 = vpack.c.bf16 %v2268, %v2264
        %v2318 = vpack.c.bf16 %v2276, %v2272
        %v2319 = vpack.c.bf16 %v2278, %v2274
        %v2320 = vpack.c.bf16 %v2286, %v2282
        %v2321 = vpack.c.bf16 %v2288, %v2284
        %v2354 = vunpack.c.l.b16 %v2290
        %v2355 = vunpack.c.l.b16 %v2291
        %v2356 = vunpack.c.h.b16 %v2290
        %v2357 = vunpack.c.h.b16 %v2291
        %v2358 = vunpack.c.l.b16 %v2292
        %v2359 = vunpack.c.l.b16 %v2293
        %v2360 = vunpack.c.h.b16 %v2292
        %v2361 = vunpack.c.h.b16 %v2293
        %v2362 = vunpack.c.l.b16 %v2294
        %v2363 = vunpack.c.l.b16 %v2295
        %v2364 = vunpack.c.h.b16 %v2294
        %v2365 = vunpack.c.h.b16 %v2295
        %v2366 = vunpack.c.l.b16 %v2296
        %v2367 = vunpack.c.l.b16 %v2297
        %v2368 = vunpack.c.h.b16 %v2296
        %v2369 = vunpack.c.h.b16 %v2297
        %v2370 = vunpack.c.l.b16 %v2298
        %v2371 = vunpack.c.l.b16 %v2299
        %v2372 = vunpack.c.h.b16 %v2298
        %v2373 = vunpack.c.h.b16 %v2299
        %v2374 = vunpack.c.l.b16 %v2300
        %v2375 = vunpack.c.l.b16 %v2301
        %v2376 = vunpack.c.h.b16 %v2300
        %v2377 = vunpack.c.h.b16 %v2301
        %v2378 = vunpack.c.l.b16 %v2302
        %v2379 = vunpack.c.l.b16 %v2303
        %v2380 = vunpack.c.h.b16 %v2302
        %v2381 = vunpack.c.h.b16 %v2303
        %v2382 = vunpack.c.l.b16 %v2304
        %v2383 = vunpack.c.l.b16 %v2305
        %v2384 = vunpack.c.h.b16 %v2304
        %v2385 = vunpack.c.h.b16 %v2305
        %v2386 = vunpack.c.l.b16 %v2306
        %v2387 = vunpack.c.l.b16 %v2307
        %v2388 = vunpack.c.h.b16 %v2306
        %v2389 = vunpack.c.h.b16 %v2307
        %v2390 = vunpack.c.l.b16 %v2308
        %v2391 = vunpack.c.l.b16 %v2309
        %v2392 = vunpack.c.h.b16 %v2308
        %v2393 = vunpack.c.h.b16 %v2309
        %v2394 = vunpack.c.l.b16 %v2310
        %v2395 = vunpack.c.l.b16 %v2311
        %v2396 = vunpack.c.h.b16 %v2310
        %v2397 = vunpack.c.h.b16 %v2311
        %v2398 = vunpack.c.l.b16 %v2312
        %v2399 = vunpack.c.l.b16 %v2313
        %v2400 = vunpack.c.h.b16 %v2312
        %v2401 = vunpack.c.h.b16 %v2313
        %v2402 = vunpack.c.l.b16 %v2314
        %v2403 = vunpack.c.l.b16 %v2315
        %v2404 = vunpack.c.h.b16 %v2314
        %v2405 = vunpack.c.h.b16 %v2315
        %v2406 = vunpack.c.l.b16 %v2316
        %v2407 = vunpack.c.l.b16 %v2317
        %v2408 = vunpack.c.h.b16 %v2316
        %v2409 = vunpack.c.h.b16 %v2317
        %v2410 = vunpack.c.l.b16 %v2318
        %v2411 = vunpack.c.l.b16 %v2319
        %v2412 = vunpack.c.h.b16 %v2318
        %v2413 = vunpack.c.h.b16 %v2319
        %v2414 = vunpack.c.l.b16 %v2320
        %v2415 = vunpack.c.l.b16 %v2321
        %v2416 = vunpack.c.h.b16 %v2320
        %v2417 = vunpack.c.h.b16 %v2321
        %v2418 = vpack.c.b16 %v2355, %v2354
        %v2419 = vpack.c.b16 %v2357, %v2356
        %v2420 = vpack.c.b16 %v2359, %v2358
        %v2421 = vpack.c.b16 %v2361, %v2360
        %v2422 = vpack.c.b16 %v2363, %v2362
        %v2423 = vpack.c.b16 %v2365, %v2364
        %v2424 = vpack.c.b16 %v2367, %v2366
        %v2425 = vpack.c.b16 %v2369, %v2368
        %v2426 = vpack.c.b16 %v2371, %v2370
        %v2427 = vpack.c.b16 %v2373, %v2372
        %v2428 = vpack.c.b16 %v2375, %v2374
        %v2429 = vpack.c.b16 %v2377, %v2376
        %v2430 = vpack.c.b16 %v2379, %v2378
        %v2431 = vpack.c.b16 %v2381, %v2380
        %v2432 = vpack.c.b16 %v2383, %v2382
        %v2433 = vpack.c.b16 %v2385, %v2384
        %v2434 = vpack.c.b16 %v2387, %v2386
        %v2435 = vpack.c.b16 %v2389, %v2388
        %v2436 = vpack.c.b16 %v2391, %v2390
        %v2437 = vpack.c.b16 %v2393, %v2392
        %v2438 = vpack.c.b16 %v2395, %v2394
        %v2439 = vpack.c.b16 %v2397, %v2396
        %v2440 = vpack.c.b16 %v2399, %v2398
        %v2441 = vpack.c.b16 %v2401, %v2400
        %v2442 = vpack.c.b16 %v2403, %v2402
        %v2443 = vpack.c.b16 %v2405, %v2404
        %v2444 = vpack.c.b16 %v2407, %v2406
        %v2445 = vpack.c.b16 %v2409, %v2408
        %v2446 = vpack.c.b16 %v2411, %v2410
        %v2447 = vpack.c.b16 %v2413, %v2412
        %v2448 = vpack.c.b16 %v2415, %v2414
        %v2449 = vpack.c.b16 %v2417, %v2416
        %2482 = vst [vmem:[%s409] sm:$0xff] %v2418
        %2483 = vst [vmem:[%s409 + $0x8] sm:$0xff] %v2419
        %2484 = vst [vmem:[%s409 + $0x10] sm:$0xff] %v2420
        %2485 = vst [vmem:[%s409 + $0x18] sm:$0xff] %v2421
        %2486 = vst [vmem:[%s409 + $0x20] sm:$0xff] %v2422
        %2487 = vst [vmem:[%s409 + $0x28] sm:$0xff] %v2423
        %2488 = vst [vmem:[%s409 + $0x30] sm:$0xff] %v2424
        %2489 = vst [vmem:[%s409 + $0x38] sm:$0xff] %v2425
        %2490 = vst [vmem:[%s409 + $0x40] sm:$0xff] %v2426
        %2491 = vst [vmem:[%s409 + $0x48] sm:$0xff] %v2427
        %2492 = vst [vmem:[%s409 + $0x50] sm:$0xff] %v2428
        %2493 = vst [vmem:[%s409 + $0x58] sm:$0xff] %v2429
        %2494 = vst [vmem:[%s409 + $0x60] sm:$0xff] %v2430
        %2495 = vst [vmem:[%s409 + $0x68] sm:$0xff] %v2431
        %2496 = vst [vmem:[%s409 + $0x70] sm:$0xff] %v2432
        %2497 = vst [vmem:[%s409 + $0x78] sm:$0xff] %v2433
        %2498 = vst [vmem:[%s409 + $0x80] sm:$0xff] %v2434
        %2499 = vst [vmem:[%s409 + $0x88] sm:$0xff] %v2435
        %2500 = vst [vmem:[%s409 + $0x90] sm:$0xff] %v2436
        %2501 = vst [vmem:[%s409 + $0x98] sm:$0xff] %v2437
        %2502 = vst [vmem:[%s409 + $0xa0] sm:$0xff] %v2438
        %2503 = vst [vmem:[%s409 + $0xa8] sm:$0xff] %v2439
        %2504 = vst [vmem:[%s409 + $0xb0] sm:$0xff] %v2440
        %2505 = vst [vmem:[%s409 + $0xb8] sm:$0xff] %v2441
        %2506 = vst [vmem:[%s409 + $0xc0] sm:$0xff] %v2442
        %2507 = vst [vmem:[%s409 + $0xc8] sm:$0xff] %v2443
        %2508 = vst [vmem:[%s409 + $0xd0] sm:$0xff] %v2444
        %2509 = vst [vmem:[%s409 + $0xd8] sm:$0xff] %v2445
        %2510 = vst [vmem:[%s409 + $0xe0] sm:$0xff] %v2446
        %2511 = vst [vmem:[%s409 + $0xe8] sm:$0xff] %v2447
        %2512 = vst [vmem:[%s409 + $0xf0] sm:$0xff] %v2448
        %2513 = vst [vmem:[%s409 + $0xf8] sm:$0xff] %v2449
        %s2514 = sand.u32 %s230, 1
        %s2515 = scalar_lea.sflag [#allocation4], %s2514
        %s2516 = sand.u32 %s230, 1
        %s2517 = smul.addr %s2516, 256
        %s2518 = scalar_lea.vmem [#allocation11], %s2517
        // Predicated region
        $region77: #{tpu_custom_call.1} parent=55 // pred_check
          %p2519 = pneg %p240
        $region78: #{tpu_custom_call.1} parent=55 // pred_check_branch
          %2521 = sbr.rel (%p2519) target = $region80
        $region79: #{tpu_custom_call.1} parent=55 // pred_region
          %s2522 = smul.u32 32, %s28
          %s2524 = ssub.s32 4096, 4096
          %2525 = vsyncadd %s2515, %s2524
          %s2526 = smul.addr %s2522, 2
          %s2527 = smul.addr %s2526, 64
          %s2528 = scalar_lea.hbm %s9, %s2527
          %s2529 = sshll.u32 %s2518, 4
          %s2530 = int_to_ptr.vmem [resolvable:$true] %s2529
          %2535 = dma.vmem_to_hbm [thread:$0]  %s2530, 4096, %s2528, %s2515, 128, 128, 8
        $region80: #{tpu_custom_call.1} parent=55 // pred_fallthru
          _
      $region56: #{tpu_custom_call.1} parent=5 // pred_fallthru
        _
      %p2536 = scmp.le.s32.totalorder 2, %s23
      // Predicated region
      $region81: #{tpu_custom_call.1} parent=5 // pred_check
        %p2537 = pneg %p2536
      $region82: #{tpu_custom_call.1} parent=5 // pred_check_branch
        %2539 = sbr.rel (%p2537) target = $region84
      $region83: #{tpu_custom_call.1} parent=5 // pred_region
        %s2540 = ssub.s32 %s23, 2
        // Predicated region
        $region85: #{tpu_custom_call.1} parent=83 // pred_check
          %p2541 = pneg %p246
        $region86: #{tpu_custom_call.1} parent=83 // pred_check_branch
          %2543 = sbr.rel (%p2541) target = $region88
        $region87: #{tpu_custom_call.1} parent=83 // pred_region
          %s2544 = sand.u32 %s231, 1
          %s2545 = scalar_lea.sflag [#allocation4], %s2544
          %s2546 = sand.u32 %s231, 1
          %s2547 = smul.addr %s2546, 256
          %s2548 = scalar_lea.vmem [#allocation11], %s2547
          %2549 = dma.done %s2545, 4096
        $region88: #{tpu_custom_call.1} parent=83 // pred_fallthru
          _
      $region84: #{tpu_custom_call.1} parent=5 // pred_fallthru
        _
    $region6: #{tpu_custom_call.1} parent=1 // loop_footer
      %s27 = sadd.s32 1, %s23
    $region7: #{tpu_custom_call.1} parent=1 // loop_footer_branch
      %22 = sbr.rel target = $region3
    $region8: #{tpu_custom_call.1} parent=1 // loop_exit
      _
    %2550 = vsyncpa [#allocation3], 1
    %s2551 = scalar_lea.sflag [#allocation3], 1
    %2552 = vsyncpa %s2551, 1
    %2553 = vsyncpa [#allocation6], 1
    %2554 = vsyncpa [#allocation9], 1
    %2555 = vsyncpa [#allocation4], 1
    %s2556 = scalar_lea.sflag [#allocation4], 1
    %2557 = vsyncpa %s2556, 1

</llo_original>
